<compile_context>
chip_gen: v7x
topology: tpu7x:2x2x1
jax: 0.10.0
libtpu: 0.0.40
codegen_flags: <defaults>
</compile_context>

<pallas_src>
import jax
import jax.numpy as jnp
from jax.experimental import pallas as pl
from jax.experimental.pallas import tpu as pltpu


LANE = 128   # lane width / alignment unit
SUBLANE = 8  # sublane alignment unit


def _round_up(x, m):
    return ((x + m - 1) // m) * m


def fcnet_kernel(x_ref, w1_ref, b1_ref, w2_ref, b2_ref, o_ref):
    """Fused per-batch-tile forward: o = relu(x @ W1 + b1) @ W2 + b2.

    x_ref:  (TB, 3072)      bf16
    w1_ref: (3072, M_pad)   bf16   (resident across grid steps)
    b1_ref: (1, M_pad)      f32
    w2_ref: (M_pad, N_pad)  bf16   (resident across grid steps)
    b2_ref: (1, N_pad)      f32
    o_ref:  (TB, N_pad)     f32
    """
    # First matmul on the MXU with f32 accumulation, bias + ReLU on the VPU.
    h = jnp.dot(x_ref[...], w1_ref[...], preferred_element_type=jnp.float32)
    h = jnp.maximum(h + b1_ref[...], 0.0)
    # Second matmul: feed bf16 activations, accumulate f32, add bias in f32.
    o = jnp.dot(h.astype(jnp.bfloat16), w2_ref[...],
                preferred_element_type=jnp.float32)
    o_ref[...] = o + b2_ref[...]


def fcnet_forward(x_nchw, w1, b1, w2, b2):
    """FCNet forward (eval-mode dropout == identity).

    x_nchw: (B, 3, 32, 32) f32
    w1:     (3072, M) f32     b1: (M,) f32
    w2:     (M, 10)   f32     b2: (10,) f32
    returns (B, 10)   f32
    """
    B = x_nchw.shape[0]
    in_features = x_nchw.shape[1] * x_nchw.shape[2] * x_nchw.shape[3]
    assert in_features == w1.shape[0] and in_features % LANE == 0
    M = w1.shape[1]
    num_classes = w2.shape[1]

    # Lane-pad hidden and class dims to multiples of 128 (zeros -> exact math).
    M_pad = _round_up(M, LANE)
    N_pad = _round_up(num_classes, LANE)

    # Batch tiling: big tiles fill the MXU when B is large, tiny B stays tiny.
    if B >= 256:
        TB = 256
    elif B >= 128:
        TB = 128
    else:
        TB = _round_up(B, SUBLANE)
    B_pad = _round_up(B, TB)
    n_tiles = pl.cdiv(B_pad, TB)

    # nn.Flatten() on NCHW: row-major flatten of (C, H, W) per batch element.
    x_flat = x_nchw.reshape(B, in_features)
    x_flat = jnp.pad(x_flat, ((0, B_pad - B), (0, 0)))

    # bf16 operands for the MXU; f32 biases (added post-accumulation).
    x_bf = x_flat.astype(jnp.bfloat16)
    w1_bf = jnp.pad(w1, ((0, 0), (0, M_pad - M))).astype(jnp.bfloat16)
    b1_f32 = jnp.pad(b1, (0, M_pad - M)).reshape(1, M_pad).astype(jnp.float32)
    w2_bf = jnp.pad(
        w2, ((0, M_pad - M), (0, N_pad - num_classes))).astype(jnp.bfloat16)
    b2_f32 = jnp.pad(
        b2, (0, N_pad - num_classes)).reshape(1, N_pad).astype(jnp.float32)

    out_padded = pl.pallas_call(
        fcnet_kernel,
        out_shape=jax.ShapeDtypeStruct((B_pad, N_pad), jnp.float32),
        grid=(n_tiles,),
        in_specs=[
            pl.BlockSpec((TB, in_features), lambda i: (i, 0)),   # x tile
            pl.BlockSpec((in_features, M_pad), lambda i: (0, 0)),  # W1 resident
            pl.BlockSpec((1, M_pad), lambda i: (0, 0)),             # b1 resident
            pl.BlockSpec((M_pad, N_pad), lambda i: (0, 0)),         # W2 resident
            pl.BlockSpec((1, N_pad), lambda i: (0, 0)),             # b2 resident
        ],
        out_specs=pl.BlockSpec((TB, N_pad), lambda i: (i, 0)),
        compiler_params=pltpu.CompilerParams(
            dimension_semantics=("parallel",),  # megacore-shard batch on v7x
        ),
    )(x_bf, w1_bf, b1_f32, w2_bf, b2_f32)

    return out_padded[:B, :num_classes]


def init_params(key, in_features=3072, M=256, num_classes=10):
    """PyTorch nn.Linear default init: U(-1/sqrt(fan_in), 1/sqrt(fan_in))."""
    k1, k2, k3, k4 = jax.random.split(key, 4)
    bound1 = 1.0 / jnp.sqrt(jnp.float32(in_features))
    bound2 = 1.0 / jnp.sqrt(jnp.float32(M))
    w1 = jax.random.uniform(k1, (in_features, M), jnp.float32, -bound1, bound1)
    b1 = jax.random.uniform(k2, (M,), jnp.float32, -bound1, bound1)
    w2 = jax.random.uniform(k3, (M, num_classes), jnp.float32, -bound2, bound2)
    b2 = jax.random.uniform(k4, (num_classes,), jnp.float32, -bound2, bound2)
    return w1, b1, w2, b2


if __name__ == "__main__":
    key = jax.random.PRNGKey(0)
    k_x, k_p = jax.random.split(key)

    # Linear(3072, M) forces C*H*W == 3072 -> CIFAR-like (3, 32, 32) inputs.
    # B kept small; M=256 (module's M is a free hyperparameter, default 1000 —
    # any M works: the wrapper zero-pads it to a multiple of 128).
    B, C, H, W = 8, 3, 32, 32
    M = 256

    x = jax.random.normal(k_x, (B, C, H, W), dtype=jnp.float32)
    w1, b1, w2, b2 = init_params(k_p, in_features=C * H * W, M=M)

    out = fcnet_forward(x, w1, b1, w2, b2)
    out = jax.block_until_ready(out)

    # Reference in plain JAX f32 (eval-mode dropout == identity). bf16 matmul
    # operands with f32 accumulation -> use a correspondingly loose tolerance.
    ref = jnp.maximum(x.reshape(B, -1) @ w1 + b1, 0.0) @ w2 + b2
    assert out.shape == (B, 10)
    assert jnp.allclose(out, ref, atol=5e-2, rtol=5e-2), (
        float(jnp.max(jnp.abs(out - ref))))

    print("KERNEL_OK")
</pallas_src>

<mosaic_0001>
module attributes {stable_mosaic.version = 11 : i64} {
  func.func @fcnet_kernel(%arg0: i32, %arg1: memref<8x3072xbf16, #tpu.memory_space<vmem>>, %arg2: memref<3072x256xbf16, #tpu.memory_space<vmem>>, %arg3: memref<1x256xf32, #tpu.memory_space<vmem>>, %arg4: memref<256x128xbf16, #tpu.memory_space<vmem>>, %arg5: memref<1x128xf32, #tpu.memory_space<vmem>>, %arg6: memref<8x128xf32, #tpu.memory_space<vmem>>) attributes {dimension_semantics = [#tpu.dimension_semantics<parallel>], iteration_bounds = array<i64: 1>, scalar_prefetch = 0 : i64, scratch_operands = 0 : i64, tpu.core_type = #tpu.core_type<tc>, window_params = [{transform_indices = @transform_0, window_bounds = array<i64: 8, 3072>}, {pipeline_mode = #tpu.pipeline_mode<synchronous>, transform_indices = @transform_1, window_bounds = array<i64: 3072, 256>}, {pipeline_mode = #tpu.pipeline_mode<synchronous>, transform_indices = @transform_2, window_bounds = array<i64: 1, 256>}, {pipeline_mode = #tpu.pipeline_mode<synchronous>, transform_indices = @transform_3, window_bounds = array<i64: 256, 128>}, {pipeline_mode = #tpu.pipeline_mode<synchronous>, transform_indices = @transform_4, window_bounds = array<i64: 1, 128>}, {transform_indices = @transform_5, window_bounds = array<i64: 8, 128>}]} {
    %c0 = arith.constant 0 : index
    %c0_0 = arith.constant 0 : index
    %0 = vector.load %arg1[%c0, %c0_0] : memref<8x3072xbf16, #tpu.memory_space<vmem>>, vector<8x3072xbf16>
    %c0_1 = arith.constant 0 : index
    %c0_2 = arith.constant 0 : index
    %1 = vector.load %arg2[%c0_1, %c0_2] : memref<3072x256xbf16, #tpu.memory_space<vmem>>, vector<3072x256xbf16>
    %cst = arith.constant dense<0.000000e+00> : vector<8x256xf32>
    %2 = tpu.matmul %0, %1, %cst {dimension_numbers = #tpu.dot_dimension_numbers<[1], [0], [0], [1], [0, 0, 1, 1], [], []>} : vector<8x3072xbf16>, vector<3072x256xbf16>, vector<8x256xf32> -> vector<8x256xf32>
    %c0_3 = arith.constant 0 : index
    %c0_4 = arith.constant 0 : index
    %3 = vector.load %arg3[%c0_3, %c0_4] : memref<1x256xf32, #tpu.memory_space<vmem>>, vector<1x256xf32>
    %4 = vector.broadcast %3 : vector<1x256xf32> to vector<8x256xf32>
    %5 = arith.addf %2, %4 : vector<8x256xf32>
    %cst_5 = arith.constant 0.000000e+00 : f32
    %6 = vector.broadcast %cst_5 : f32 to vector<8x256xf32>
    %7 = arith.maximumf %5, %6 : vector<8x256xf32>
    %8 = arith.truncf %7 : vector<8x256xf32> to vector<8x256xbf16>
    %c0_6 = arith.constant 0 : index
    %c0_7 = arith.constant 0 : index
    %9 = vector.load %arg4[%c0_6, %c0_7] : memref<256x128xbf16, #tpu.memory_space<vmem>>, vector<256x128xbf16>
    %cst_8 = arith.constant dense<0.000000e+00> : vector<8x128xf32>
    %10 = tpu.matmul %8, %9, %cst_8 {dimension_numbers = #tpu.dot_dimension_numbers<[1], [0], [0], [1], [0, 0, 1, 1], [], []>} : vector<8x256xbf16>, vector<256x128xbf16>, vector<8x128xf32> -> vector<8x128xf32>
    %c0_9 = arith.constant 0 : index
    %c0_10 = arith.constant 0 : index
    %11 = vector.load %arg5[%c0_9, %c0_10] : memref<1x128xf32, #tpu.memory_space<vmem>>, vector<1x128xf32>
    %12 = vector.broadcast %11 : vector<1x128xf32> to vector<8x128xf32>
    %13 = arith.addf %10, %12 : vector<8x128xf32>
    %c0_11 = arith.constant 0 : index
    %c0_12 = arith.constant 0 : index
    %14 = vector.load %arg6[%c0_11, %c0_12] : memref<8x128xf32, #tpu.memory_space<vmem>>, vector<8x128xf32>
    tpu.vector_store %arg6[%c0_11, %c0_12], %13 {strides = array<i32>} : memref<8x128xf32, #tpu.memory_space<vmem>>, vector<8x128xf32>,
    return
  }
  func.func @transform_0(%arg0: i32) -> (i32, i32) {
    %c0_i32 = arith.constant 0 : i32
    %c0_i32_0 = arith.constant 0 : i32
    return %arg0, %c0_i32 : i32, i32
  }
  func.func @transform_1(%arg0: i32) -> (i32, i32) {
    %c0_i32 = arith.constant 0 : i32
    %c0_i32_0 = arith.constant 0 : i32
    %c0_i32_1 = arith.constant 0 : i32
    return %c0_i32, %c0_i32_0 : i32, i32
  }
  func.func @transform_2(%arg0: i32) -> (i32, i32) {
    %c0_i32 = arith.constant 0 : i32
    %c0_i32_0 = arith.constant 0 : i32
    %c0_i32_1 = arith.constant 0 : i32
    return %c0_i32, %c0_i32_0 : i32, i32
  }
  func.func @transform_3(%arg0: i32) -> (i32, i32) {
    %c0_i32 = arith.constant 0 : i32
    %c0_i32_0 = arith.constant 0 : i32
    %c0_i32_1 = arith.constant 0 : i32
    return %c0_i32, %c0_i32_0 : i32, i32
  }
  func.func @transform_4(%arg0: i32) -> (i32, i32) {
    %c0_i32 = arith.constant 0 : i32
    %c0_i32_0 = arith.constant 0 : i32
    %c0_i32_1 = arith.constant 0 : i32
    return %c0_i32, %c0_i32_0 : i32, i32
  }
  func.func @transform_5(%arg0: i32) -> (i32, i32) {
    %c0_i32 = arith.constant 0 : i32
    %c0_i32_0 = arith.constant 0 : i32
    return %arg0, %c0_i32 : i32, i32
  }
}

</mosaic_0001>

<llo_original>
// kernel: tpu_custom_call.1
$region0: #{tpu_custom_call.1}
  #allocation0 [shape = 'u32[]', space=smem, size = 0x4, offset = 0x4, fixed_abs, tag = 'smem constant byte address 0x4 - core index']
  #allocation1 [shape = 'u32[144,128]{1,0:T(1,128)}', space=vmem, size = 0x12000, scoped, tag = 'internal scratch']
  %s0 = inlined_call_operand.hbm [shape: bf16[8,3072], index: 0, kind: input, shape index: {}]
  %s1 = inlined_call_operand.hbm [shape: bf16[3072,256], index: 1, kind: input, shape index: {}]
  %s2 = inlined_call_operand.hbm [shape: f32[1,256], index: 2, kind: input, shape index: {}]
  %s3 = inlined_call_operand.hbm [shape: bf16[256,128], index: 3, kind: input, shape index: {}]
  %s4 = inlined_call_operand.hbm [shape: f32[1,128], index: 4, kind: input, shape index: {}]
  %s5 = inlined_call_operand.hbm [shape: f32[8,128], index: 5, kind: output, shape index: {}]
  %s6 = sld [smem:[#allocation0]]
  $region50: #{tpu_custom_call.1} parent=0
    _
  %s8 = ssub.s32 1, %s6
  %s9 = scalar_select 0, %s8, %s6
  $region1: #{tpu_custom_call.1} parent=0
    #allocation2 [shape = 'u8[49152]{0}', space=vmem, size = 0xc000, scoped, tag = 'input window, operand 0, single buffered']
    #allocation3 [shape = 's32[1]{0}', space=sflag, size = 0x4, scoped, tag = 'scoped memory for tpu_custom_call.1']
    #allocation4 [shape = 's32[1]{0}', space=sflag, size = 0x4, scoped, tag = 'scoped memory for tpu_custom_call.1']
    #allocation5 [shape = 'u8[1572864]{0}', space=vmem, size = 0x180000, scoped, tag = 'input window, operand 1, single buffered']
    #allocation6 [shape = 's32[1]{0}', space=sflag, size = 0x4, scoped, tag = 'scoped memory for tpu_custom_call.1']
    #allocation7 [shape = 'u8[1024]{0}', space=vmem, size = 0x400, scoped, tag = 'input window, operand 2, single buffered']
    #allocation8 [shape = 'u8[65536]{0}', space=vmem, size = 0x10000, scoped, tag = 'input window, operand 3, single buffered']
    #allocation9 [shape = 's32[1]{0}', space=sflag, size = 0x4, scoped, tag = 'scoped memory for tpu_custom_call.1']
    #allocation10 [shape = 'u8[512]{0}', space=vmem, size = 0x400, scoped, tag = 'input window, operand 4, single buffered']
    #allocation11 [shape = 'u8[4096]{0}', space=vmem, size = 0x1000, scoped, tag = 'output window, operand 0, single buffered']
    %10 = vsyncpa [#allocation3], 0
    %11 = vsyncpa [#allocation6], 0
    %12 = vsyncpa [#allocation9], 0
    %13 = vsyncpa [#allocation4], 0
    // Predicated region
    $region2: #{tpu_custom_call.1} parent=1 // pred_check
      _
    $region3: #{tpu_custom_call.1} parent=1 // pred_check_branch
      %15 = sbr.rel (0) target = $region5
    $region4: #{tpu_custom_call.1} parent=1 // pred_region
      %s17 = ssub.s32 1536, 1536
      %18 = vsyncadd [#allocation3], %s17
      %s20 = sshll.u32 [#allocation2], 4
      %s21 = int_to_ptr.vmem [resolvable:$true] %s20
      %23 = dma.hbm_to_vmem [thread:$0]  %s0, 1536, %s21, [#allocation3]
    $region5: #{tpu_custom_call.1} parent=1 // pred_fallthru
      _
    // Predicated region
    $region6: #{tpu_custom_call.1} parent=1 // pred_check
      _
    $region7: #{tpu_custom_call.1} parent=1 // pred_check_branch
      %25 = sbr.rel (0) target = $region9
    $region8: #{tpu_custom_call.1} parent=1 // pred_region
      %s27 = ssub.s32 49152, 49152
      %28 = vsyncadd [#allocation6], %s27
      %s29 = sshll.u32 [#allocation5], 4
      %s30 = int_to_ptr.vmem [resolvable:$true] %s29
      %35 = dma.hbm_to_vmem [thread:$0]  %s1, 49152, %s30, [#allocation6], 128, 128, 8
    $region9: #{tpu_custom_call.1} parent=1 // pred_fallthru
      _
    // Predicated region
    $region10: #{tpu_custom_call.1} parent=1 // pred_check
      _
    $region11: #{tpu_custom_call.1} parent=1 // pred_check_branch
      %37 = sbr.rel (0) target = $region13
    $region12: #{tpu_custom_call.1} parent=1 // pred_region
      %s39 = ssub.s32 32, 32
      %40 = vsyncadd [#allocation6], %s39
      %s42 = sshll.u32 [#allocation7], 4
      %s43 = int_to_ptr.vmem [resolvable:$true] %s42
      %45 = dma.hbm_to_vmem [thread:$0]  %s2, 32, %s43, [#allocation6]
    $region13: #{tpu_custom_call.1} parent=1 // pred_fallthru
      _
    // Predicated region
    $region14: #{tpu_custom_call.1} parent=1 // pred_check
      _
    $region15: #{tpu_custom_call.1} parent=1 // pred_check_branch
      %47 = sbr.rel (0) target = $region17
    $region16: #{tpu_custom_call.1} parent=1 // pred_region
      %s49 = ssub.s32 2048, 2048
      %50 = vsyncadd [#allocation9], %s49
      %s51 = sshll.u32 [#allocation8], 4
      %s52 = int_to_ptr.vmem [resolvable:$true] %s51
      %57 = dma.hbm_to_vmem [thread:$0]  %s3, 2048, %s52, [#allocation9], 64, 64, 4
    $region17: #{tpu_custom_call.1} parent=1 // pred_fallthru
      _
    // Predicated region
    $region18: #{tpu_custom_call.1} parent=1 // pred_check
      _
    $region19: #{tpu_custom_call.1} parent=1 // pred_check_branch
      %59 = sbr.rel (0) target = $region21
    $region20: #{tpu_custom_call.1} parent=1 // pred_region
      %s61 = ssub.s32 16, 16
      %62 = vsyncadd [#allocation9], %s61
      %s64 = sshll.u32 [#allocation10], 4
      %s65 = int_to_ptr.vmem [resolvable:$true] %s64
      %67 = dma.hbm_to_vmem [thread:$0]  %s4, 16, %s65, [#allocation9]
    $region21: #{tpu_custom_call.1} parent=1 // pred_fallthru
      _
    // Predicated region
    $region22: #{tpu_custom_call.1} parent=1 // pred_check
      _
    $region23: #{tpu_custom_call.1} parent=1 // pred_check_branch
      %69 = sbr.rel (0) target = $region25
    $region24: #{tpu_custom_call.1} parent=1 // pred_region
      %70 = dma.done [#allocation3], 1536
    $region25: #{tpu_custom_call.1} parent=1 // pred_fallthru
      _
    // Predicated region
    $region26: #{tpu_custom_call.1} parent=1 // pred_check
      _
    $region27: #{tpu_custom_call.1} parent=1 // pred_check_branch
      %72 = sbr.rel (0) target = $region29
    $region28: #{tpu_custom_call.1} parent=1 // pred_region
      %73 = dma.done [#allocation6], 49152
    $region29: #{tpu_custom_call.1} parent=1 // pred_fallthru
      _
    // Predicated region
    $region30: #{tpu_custom_call.1} parent=1 // pred_check
      _
    $region31: #{tpu_custom_call.1} parent=1 // pred_check_branch
      %75 = sbr.rel (0) target = $region33
    $region32: #{tpu_custom_call.1} parent=1 // pred_region
      %76 = dma.done [#allocation6], 32
    $region33: #{tpu_custom_call.1} parent=1 // pred_fallthru
      _
    // Predicated region
    $region34: #{tpu_custom_call.1} parent=1 // pred_check
      _
    $region35: #{tpu_custom_call.1} parent=1 // pred_check_branch
      %78 = sbr.rel (0) target = $region37
    $region36: #{tpu_custom_call.1} parent=1 // pred_region
      %79 = dma.done [#allocation9], 2048
    $region37: #{tpu_custom_call.1} parent=1 // pred_fallthru
      _
    // Predicated region
    $region38: #{tpu_custom_call.1} parent=1 // pred_check
      _
    $region39: #{tpu_custom_call.1} parent=1 // pred_check_branch
      %81 = sbr.rel (0) target = $region41
    $region40: #{tpu_custom_call.1} parent=1 // pred_region
      %82 = dma.done [#allocation9], 16
    $region41: #{tpu_custom_call.1} parent=1 // pred_fallthru
      _
    %v84 = vld [vmem:[#allocation2] sm:$0xff]
    %v85 = vld [vmem:[#allocation2 + $0x8] sm:$0xff]
    %v86 = vld [vmem:[#allocation2 + $0x10] sm:$0xff]
    %v87 = vld [vmem:[#allocation2 + $0x18] sm:$0xff]
    %v88 = vld [vmem:[#allocation2 + $0x20] sm:$0xff]
    %v89 = vld [vmem:[#allocation2 + $0x28] sm:$0xff]
    %v90 = vld [vmem:[#allocation2 + $0x30] sm:$0xff]
    %v91 = vld [vmem:[#allocation2 + $0x38] sm:$0xff]
    %v92 = vld [vmem:[#allocation2 + $0x40] sm:$0xff]
    %v93 = vld [vmem:[#allocation2 + $0x48] sm:$0xff]
    %v94 = vld [vmem:[#allocation2 + $0x50] sm:$0xff]
    %v95 = vld [vmem:[#allocation2 + $0x58] sm:$0xff]
    %v96 = vld [vmem:[#allocation5] sm:$0xff]
    %v97 = vld [vmem:[#allocation5 + $0x8] sm:$0xff]
    %v98 = vld [vmem:[#allocation5 + $0x10] sm:$0xff]
    %v99 = vld [vmem:[#allocation5 + $0x18] sm:$0xff]
    %v100 = vld [vmem:[#allocation5 + $0x20] sm:$0xff]
    %v101 = vld [vmem:[#allocation5 + $0x28] sm:$0xff]
    %v102 = vld [vmem:[#allocation5 + $0x30] sm:$0xff]
    %v103 = vld [vmem:[#allocation5 + $0x38] sm:$0xff]
    %v104 = vld [vmem:[#allocation5 + $0x40] sm:$0xff]
    %v105 = vld [vmem:[#allocation5 + $0x48] sm:$0xff]
    %v106 = vld [vmem:[#allocation5 + $0x50] sm:$0xff]
    %v107 = vld [vmem:[#allocation5 + $0x58] sm:$0xff]
    %v108 = vld [vmem:[#allocation5 + $0x60] sm:$0xff]
    %v109 = vld [vmem:[#allocation5 + $0x68] sm:$0xff]
    %v110 = vld [vmem:[#allocation5 + $0x70] sm:$0xff]
    %v111 = vld [vmem:[#allocation5 + $0x78] sm:$0xff]
    %v112 = vld [vmem:[#allocation5 + $0x80] sm:$0xff]
    %v113 = vld [vmem:[#allocation5 + $0x88] sm:$0xff]
    %v114 = vld [vmem:[#allocation5 + $0x90] sm:$0xff]
    %v115 = vld [vmem:[#allocation5 + $0x98] sm:$0xff]
    %v116 = vld [vmem:[#allocation5 + $0xa0] sm:$0xff]
    %v117 = vld [vmem:[#allocation5 + $0xa8] sm:$0xff]
    %v118 = vld [vmem:[#allocation5 + $0xb0] sm:$0xff]
    %v119 = vld [vmem:[#allocation5 + $0xb8] sm:$0xff]
    %v120 = vld [vmem:[#allocation5 + $0xc0] sm:$0xff]
    %v121 = vld [vmem:[#allocation5 + $0xc8] sm:$0xff]
    %v122 = vld [vmem:[#allocation5 + $0xd0] sm:$0xff]
    %v123 = vld [vmem:[#allocation5 + $0xd8] sm:$0xff]
    %v124 = vld [vmem:[#allocation5 + $0xe0] sm:$0xff]
    %v125 = vld [vmem:[#allocation5 + $0xe8] sm:$0xff]
    %v126 = vld [vmem:[#allocation5 + $0xf0] sm:$0xff]
    %v127 = vld [vmem:[#allocation5 + $0xf8] sm:$0xff]
    %v128 = vld [vmem:[#allocation5 + $0x100] sm:$0xff]
    %v129 = vld [vmem:[#allocation5 + $0x108] sm:$0xff]
    %v130 = vld [vmem:[#allocation5 + $0x110] sm:$0xff]
    %v131 = vld [vmem:[#allocation5 + $0x118] sm:$0xff]
    %v132 = vld [vmem:[#allocation5 + $0x120] sm:$0xff]
    %v133 = vld [vmem:[#allocation5 + $0x128] sm:$0xff]
    %v134 = vld [vmem:[#allocation5 + $0x130] sm:$0xff]
    %v135 = vld [vmem:[#allocation5 + $0x138] sm:$0xff]
    %v136 = vld [vmem:[#allocation5 + $0x140] sm:$0xff]
    %v137 = vld [vmem:[#allocation5 + $0x148] sm:$0xff]
    %v138 = vld [vmem:[#allocation5 + $0x150] sm:$0xff]
    %v139 = vld [vmem:[#allocation5 + $0x158] sm:$0xff]
    %v140 = vld [vmem:[#allocation5 + $0x160] sm:$0xff]
    %v141 = vld [vmem:[#allocation5 + $0x168] sm:$0xff]
    %v142 = vld [vmem:[#allocation5 + $0x170] sm:$0xff]
    %v143 = vld [vmem:[#allocation5 + $0x178] sm:$0xff]
    %v144 = vld [vmem:[#allocation5 + $0x180] sm:$0xff]
    %v145 = vld [vmem:[#allocation5 + $0x188] sm:$0xff]
    %v146 = vld [vmem:[#allocation5 + $0x190] sm:$0xff]
    %v147 = vld [vmem:[#allocation5 + $0x198] sm:$0xff]
    %v148 = vld [vmem:[#allocation5 + $0x1a0] sm:$0xff]
    %v149 = vld [vmem:[#allocation5 + $0x1a8] sm:$0xff]
    %v150 = vld [vmem:[#allocation5 + $0x1b0] sm:$0xff]
    %v151 = vld [vmem:[#allocation5 + $0x1b8] sm:$0xff]
    %v152 = vld [vmem:[#allocation5 + $0x1c0] sm:$0xff]
    %v153 = vld [vmem:[#allocation5 + $0x1c8] sm:$0xff]
    %v154 = vld [vmem:[#allocation5 + $0x1d0] sm:$0xff]
    %v155 = vld [vmem:[#allocation5 + $0x1d8] sm:$0xff]
    %v156 = vld [vmem:[#allocation5 + $0x1e0] sm:$0xff]
    %v157 = vld [vmem:[#allocation5 + $0x1e8] sm:$0xff]
    %v158 = vld [vmem:[#allocation5 + $0x1f0] sm:$0xff]
    %v159 = vld [vmem:[#allocation5 + $0x1f8] sm:$0xff]
    %v160 = vld [vmem:[#allocation5 + $0x200] sm:$0xff]
    %v161 = vld [vmem:[#allocation5 + $0x208] sm:$0xff]
    %v162 = vld [vmem:[#allocation5 + $0x210] sm:$0xff]
    %v163 = vld [vmem:[#allocation5 + $0x218] sm:$0xff]
    %v164 = vld [vmem:[#allocation5 + $0x220] sm:$0xff]
    %v165 = vld [vmem:[#allocation5 + $0x228] sm:$0xff]
    %v166 = vld [vmem:[#allocation5 + $0x230] sm:$0xff]
    %v167 = vld [vmem:[#allocation5 + $0x238] sm:$0xff]
    %v168 = vld [vmem:[#allocation5 + $0x240] sm:$0xff]
    %v169 = vld [vmem:[#allocation5 + $0x248] sm:$0xff]
    %v170 = vld [vmem:[#allocation5 + $0x250] sm:$0xff]
    %v171 = vld [vmem:[#allocation5 + $0x258] sm:$0xff]
    %v172 = vld [vmem:[#allocation5 + $0x260] sm:$0xff]
    %v173 = vld [vmem:[#allocation5 + $0x268] sm:$0xff]
    %v174 = vld [vmem:[#allocation5 + $0x270] sm:$0xff]
    %v175 = vld [vmem:[#allocation5 + $0x278] sm:$0xff]
    %v176 = vld [vmem:[#allocation5 + $0x280] sm:$0xff]
    %v177 = vld [vmem:[#allocation5 + $0x288] sm:$0xff]
    %v178 = vld [vmem:[#allocation5 + $0x290] sm:$0xff]
    %v179 = vld [vmem:[#allocation5 + $0x298] sm:$0xff]
    %v180 = vld [vmem:[#allocation5 + $0x2a0] sm:$0xff]
    %v181 = vld [vmem:[#allocation5 + $0x2a8] sm:$0xff]
    %v182 = vld [vmem:[#allocation5 + $0x2b0] sm:$0xff]
    %v183 = vld [vmem:[#allocation5 + $0x2b8] sm:$0xff]
    %v184 = vld [vmem:[#allocation5 + $0x2c0] sm:$0xff]
    %v185 = vld [vmem:[#allocation5 + $0x2c8] sm:$0xff]
    %v186 = vld [vmem:[#allocation5 + $0x2d0] sm:$0xff]
    %v187 = vld [vmem:[#allocation5 + $0x2d8] sm:$0xff]
    %v188 = vld [vmem:[#allocation5 + $0x2e0] sm:$0xff]
    %v189 = vld [vmem:[#allocation5 + $0x2e8] sm:$0xff]
    %v190 = vld [vmem:[#allocation5 + $0x2f0] sm:$0xff]
    %v191 = vld [vmem:[#allocation5 + $0x2f8] sm:$0xff]
    %v192 = vld [vmem:[#allocation5 + $0x300] sm:$0xff]
    %v193 = vld [vmem:[#allocation5 + $0x308] sm:$0xff]
    %v194 = vld [vmem:[#allocation5 + $0x310] sm:$0xff]
    %v195 = vld [vmem:[#allocation5 + $0x318] sm:$0xff]
    %v196 = vld [vmem:[#allocation5 + $0x320] sm:$0xff]
    %v197 = vld [vmem:[#allocation5 + $0x328] sm:$0xff]
    %v198 = vld [vmem:[#allocation5 + $0x330] sm:$0xff]
    %v199 = vld [vmem:[#allocation5 + $0x338] sm:$0xff]
    %v200 = vld [vmem:[#allocation5 + $0x340] sm:$0xff]
    %v201 = vld [vmem:[#allocation5 + $0x348] sm:$0xff]
    %v202 = vld [vmem:[#allocation5 + $0x350] sm:$0xff]
    %v203 = vld [vmem:[#allocation5 + $0x358] sm:$0xff]
    %v204 = vld [vmem:[#allocation5 + $0x360] sm:$0xff]
    %v205 = vld [vmem:[#allocation5 + $0x368] sm:$0xff]
    %v206 = vld [vmem:[#allocation5 + $0x370] sm:$0xff]
    %v207 = vld [vmem:[#allocation5 + $0x378] sm:$0xff]
    %v208 = vld [vmem:[#allocation5 + $0x380] sm:$0xff]
    %v209 = vld [vmem:[#allocation5 + $0x388] sm:$0xff]
    %v210 = vld [vmem:[#allocation5 + $0x390] sm:$0xff]
    %v211 = vld [vmem:[#allocation5 + $0x398] sm:$0xff]
    %v212 = vld [vmem:[#allocation5 + $0x3a0] sm:$0xff]
    %v213 = vld [vmem:[#allocation5 + $0x3a8] sm:$0xff]
    %v214 = vld [vmem:[#allocation5 + $0x3b0] sm:$0xff]
    %v215 = vld [vmem:[#allocation5 + $0x3b8] sm:$0xff]
    %v216 = vld [vmem:[#allocation5 + $0x3c0] sm:$0xff]
    %v217 = vld [vmem:[#allocation5 + $0x3c8] sm:$0xff]
    %v218 = vld [vmem:[#allocation5 + $0x3d0] sm:$0xff]
    %v219 = vld [vmem:[#allocation5 + $0x3d8] sm:$0xff]
    %v220 = vld [vmem:[#allocation5 + $0x3e0] sm:$0xff]
    %v221 = vld [vmem:[#allocation5 + $0x3e8] sm:$0xff]
    %v222 = vld [vmem:[#allocation5 + $0x3f0] sm:$0xff]
    %v223 = vld [vmem:[#allocation5 + $0x3f8] sm:$0xff]
    %v224 = vld [vmem:[#allocation5 + $0x400] sm:$0xff]
    %v225 = vld [vmem:[#allocation5 + $0x408] sm:$0xff]
    %v226 = vld [vmem:[#allocation5 + $0x410] sm:$0xff]
    %v227 = vld [vmem:[#allocation5 + $0x418] sm:$0xff]
    %v228 = vld [vmem:[#allocation5 + $0x420] sm:$0xff]
    %v229 = vld [vmem:[#allocation5 + $0x428] sm:$0xff]
    %v230 = vld [vmem:[#allocation5 + $0x430] sm:$0xff]
    %v231 = vld [vmem:[#allocation5 + $0x438] sm:$0xff]
    %v232 = vld [vmem:[#allocation5 + $0x440] sm:$0xff]
    %v233 = vld [vmem:[#allocation5 + $0x448] sm:$0xff]
    %v234 = vld [vmem:[#allocation5 + $0x450] sm:$0xff]
    %v235 = vld [vmem:[#allocation5 + $0x458] sm:$0xff]
    %v236 = vld [vmem:[#allocation5 + $0x460] sm:$0xff]
    %v237 = vld [vmem:[#allocation5 + $0x468] sm:$0xff]
    %v238 = vld [vmem:[#allocation5 + $0x470] sm:$0xff]
    %v239 = vld [vmem:[#allocation5 + $0x478] sm:$0xff]
    %v240 = vld [vmem:[#allocation5 + $0x480] sm:$0xff]
    %v241 = vld [vmem:[#allocation5 + $0x488] sm:$0xff]
    %v242 = vld [vmem:[#allocation5 + $0x490] sm:$0xff]
    %v243 = vld [vmem:[#allocation5 + $0x498] sm:$0xff]
    %v244 = vld [vmem:[#allocation5 + $0x4a0] sm:$0xff]
    %v245 = vld [vmem:[#allocation5 + $0x4a8] sm:$0xff]
    %v246 = vld [vmem:[#allocation5 + $0x4b0] sm:$0xff]
    %v247 = vld [vmem:[#allocation5 + $0x4b8] sm:$0xff]
    %v248 = vld [vmem:[#allocation5 + $0x4c0] sm:$0xff]
    %v249 = vld [vmem:[#allocation5 + $0x4c8] sm:$0xff]
    %v250 = vld [vmem:[#allocation5 + $0x4d0] sm:$0xff]
    %v251 = vld [vmem:[#allocation5 + $0x4d8] sm:$0xff]
    %v252 = vld [vmem:[#allocation5 + $0x4e0] sm:$0xff]
    %v253 = vld [vmem:[#allocation5 + $0x4e8] sm:$0xff]
    %v254 = vld [vmem:[#allocation5 + $0x4f0] sm:$0xff]
    %v255 = vld [vmem:[#allocation5 + $0x4f8] sm:$0xff]
    %v256 = vld [vmem:[#allocation5 + $0x500] sm:$0xff]
    %v257 = vld [vmem:[#allocation5 + $0x508] sm:$0xff]
    %v258 = vld [vmem:[#allocation5 + $0x510] sm:$0xff]
    %v259 = vld [vmem:[#allocation5 + $0x518] sm:$0xff]
    %v260 = vld [vmem:[#allocation5 + $0x520] sm:$0xff]
    %v261 = vld [vmem:[#allocation5 + $0x528] sm:$0xff]
    %v262 = vld [vmem:[#allocation5 + $0x530] sm:$0xff]
    %v263 = vld [vmem:[#allocation5 + $0x538] sm:$0xff]
    %v264 = vld [vmem:[#allocation5 + $0x540] sm:$0xff]
    %v265 = vld [vmem:[#allocation5 + $0x548] sm:$0xff]
    %v266 = vld [vmem:[#allocation5 + $0x550] sm:$0xff]
    %v267 = vld [vmem:[#allocation5 + $0x558] sm:$0xff]
    %v268 = vld [vmem:[#allocation5 + $0x560] sm:$0xff]
    %v269 = vld [vmem:[#allocation5 + $0x568] sm:$0xff]
    %v270 = vld [vmem:[#allocation5 + $0x570] sm:$0xff]
    %v271 = vld [vmem:[#allocation5 + $0x578] sm:$0xff]
    %v272 = vld [vmem:[#allocation5 + $0x580] sm:$0xff]
    %v273 = vld [vmem:[#allocation5 + $0x588] sm:$0xff]
    %v274 = vld [vmem:[#allocation5 + $0x590] sm:$0xff]
    %v275 = vld [vmem:[#allocation5 + $0x598] sm:$0xff]
    %v276 = vld [vmem:[#allocation5 + $0x5a0] sm:$0xff]
    %v277 = vld [vmem:[#allocation5 + $0x5a8] sm:$0xff]
    %v278 = vld [vmem:[#allocation5 + $0x5b0] sm:$0xff]
    %v279 = vld [vmem:[#allocation5 + $0x5b8] sm:$0xff]
    %v280 = vld [vmem:[#allocation5 + $0x5c0] sm:$0xff]
    %v281 = vld [vmem:[#allocation5 + $0x5c8] sm:$0xff]
    %v282 = vld [vmem:[#allocation5 + $0x5d0] sm:$0xff]
    %v283 = vld [vmem:[#allocation5 + $0x5d8] sm:$0xff]
    %v284 = vld [vmem:[#allocation5 + $0x5e0] sm:$0xff]
    %v285 = vld [vmem:[#allocation5 + $0x5e8] sm:$0xff]
    %v286 = vld [vmem:[#allocation5 + $0x5f0] sm:$0xff]
    %v287 = vld [vmem:[#allocation5 + $0x5f8] sm:$0xff]
    %v288 = vld [vmem:[#allocation5 + $0x600] sm:$0xff]
    %v289 = vld [vmem:[#allocation5 + $0x608] sm:$0xff]
    %v290 = vld [vmem:[#allocation5 + $0x610] sm:$0xff]
    %v291 = vld [vmem:[#allocation5 + $0x618] sm:$0xff]
    %v292 = vld [vmem:[#allocation5 + $0x620] sm:$0xff]
    %v293 = vld [vmem:[#allocation5 + $0x628] sm:$0xff]
    %v294 = vld [vmem:[#allocation5 + $0x630] sm:$0xff]
    %v295 = vld [vmem:[#allocation5 + $0x638] sm:$0xff]
    %v296 = vld [vmem:[#allocation5 + $0x640] sm:$0xff]
    %v297 = vld [vmem:[#allocation5 + $0x648] sm:$0xff]
    %v298 = vld [vmem:[#allocation5 + $0x650] sm:$0xff]
    %v299 = vld [vmem:[#allocation5 + $0x658] sm:$0xff]
    %v300 = vld [vmem:[#allocation5 + $0x660] sm:$0xff]
    %v301 = vld [vmem:[#allocation5 + $0x668] sm:$0xff]
    %v302 = vld [vmem:[#allocation5 + $0x670] sm:$0xff]
    %v303 = vld [vmem:[#allocation5 + $0x678] sm:$0xff]
    %v304 = vld [vmem:[#allocation5 + $0x680] sm:$0xff]
    %v305 = vld [vmem:[#allocation5 + $0x688] sm:$0xff]
    %v306 = vld [vmem:[#allocation5 + $0x690] sm:$0xff]
    %v307 = vld [vmem:[#allocation5 + $0x698] sm:$0xff]
    %v308 = vld [vmem:[#allocation5 + $0x6a0] sm:$0xff]
    %v309 = vld [vmem:[#allocation5 + $0x6a8] sm:$0xff]
    %v310 = vld [vmem:[#allocation5 + $0x6b0] sm:$0xff]
    %v311 = vld [vmem:[#allocation5 + $0x6b8] sm:$0xff]
    %v312 = vld [vmem:[#allocation5 + $0x6c0] sm:$0xff]
    %v313 = vld [vmem:[#allocation5 + $0x6c8] sm:$0xff]
    %v314 = vld [vmem:[#allocation5 + $0x6d0] sm:$0xff]
    %v315 = vld [vmem:[#allocation5 + $0x6d8] sm:$0xff]
    %v316 = vld [vmem:[#allocation5 + $0x6e0] sm:$0xff]
    %v317 = vld [vmem:[#allocation5 + $0x6e8] sm:$0xff]
    %v318 = vld [vmem:[#allocation5 + $0x6f0] sm:$0xff]
    %v319 = vld [vmem:[#allocation5 + $0x6f8] sm:$0xff]
    %v320 = vld [vmem:[#allocation5 + $0x700] sm:$0xff]
    %v321 = vld [vmem:[#allocation5 + $0x708] sm:$0xff]
    %v322 = vld [vmem:[#allocation5 + $0x710] sm:$0xff]
    %v323 = vld [vmem:[#allocation5 + $0x718] sm:$0xff]
    %v324 = vld [vmem:[#allocation5 + $0x720] sm:$0xff]
    %v325 = vld [vmem:[#allocation5 + $0x728] sm:$0xff]
    %v326 = vld [vmem:[#allocation5 + $0x730] sm:$0xff]
    %v327 = vld [vmem:[#allocation5 + $0x738] sm:$0xff]
    %v328 = vld [vmem:[#allocation5 + $0x740] sm:$0xff]
    %v329 = vld [vmem:[#allocation5 + $0x748] sm:$0xff]
    %v330 = vld [vmem:[#allocation5 + $0x750] sm:$0xff]
    %v331 = vld [vmem:[#allocation5 + $0x758] sm:$0xff]
    %v332 = vld [vmem:[#allocation5 + $0x760] sm:$0xff]
    %v333 = vld [vmem:[#allocation5 + $0x768] sm:$0xff]
    %v334 = vld [vmem:[#allocation5 + $0x770] sm:$0xff]
    %v335 = vld [vmem:[#allocation5 + $0x778] sm:$0xff]
    %v336 = vld [vmem:[#allocation5 + $0x780] sm:$0xff]
    %v337 = vld [vmem:[#allocation5 + $0x788] sm:$0xff]
    %v338 = vld [vmem:[#allocation5 + $0x790] sm:$0xff]
    %v339 = vld [vmem:[#allocation5 + $0x798] sm:$0xff]
    %v340 = vld [vmem:[#allocation5 + $0x7a0] sm:$0xff]
    %v341 = vld [vmem:[#allocation5 + $0x7a8] sm:$0xff]
    %v342 = vld [vmem:[#allocation5 + $0x7b0] sm:$0xff]
    %v343 = vld [vmem:[#allocation5 + $0x7b8] sm:$0xff]
    %v344 = vld [vmem:[#allocation5 + $0x7c0] sm:$0xff]
    %v345 = vld [vmem:[#allocation5 + $0x7c8] sm:$0xff]
    %v346 = vld [vmem:[#allocation5 + $0x7d0] sm:$0xff]
    %v347 = vld [vmem:[#allocation5 + $0x7d8] sm:$0xff]
    %v348 = vld [vmem:[#allocation5 + $0x7e0] sm:$0xff]
    %v349 = vld [vmem:[#allocation5 + $0x7e8] sm:$0xff]
    %v350 = vld [vmem:[#allocation5 + $0x7f0] sm:$0xff]
    %v351 = vld [vmem:[#allocation5 + $0x7f8] sm:$0xff]
    %v352 = vld [vmem:[#allocation5 + $0x800] sm:$0xff]
    %v353 = vld [vmem:[#allocation5 + $0x808] sm:$0xff]
    %v354 = vld [vmem:[#allocation5 + $0x810] sm:$0xff]
    %v355 = vld [vmem:[#allocation5 + $0x818] sm:$0xff]
    %v356 = vld [vmem:[#allocation5 + $0x820] sm:$0xff]
    %v357 = vld [vmem:[#allocation5 + $0x828] sm:$0xff]
    %v358 = vld [vmem:[#allocation5 + $0x830] sm:$0xff]
    %v359 = vld [vmem:[#allocation5 + $0x838] sm:$0xff]
    %v360 = vld [vmem:[#allocation5 + $0x840] sm:$0xff]
    %v361 = vld [vmem:[#allocation5 + $0x848] sm:$0xff]
    %v362 = vld [vmem:[#allocation5 + $0x850] sm:$0xff]
    %v363 = vld [vmem:[#allocation5 + $0x858] sm:$0xff]
    %v364 = vld [vmem:[#allocation5 + $0x860] sm:$0xff]
    %v365 = vld [vmem:[#allocation5 + $0x868] sm:$0xff]
    %v366 = vld [vmem:[#allocation5 + $0x870] sm:$0xff]
    %v367 = vld [vmem:[#allocation5 + $0x878] sm:$0xff]
    %v368 = vld [vmem:[#allocation5 + $0x880] sm:$0xff]
    %v369 = vld [vmem:[#allocation5 + $0x888] sm:$0xff]
    %v370 = vld [vmem:[#allocation5 + $0x890] sm:$0xff]
    %v371 = vld [vmem:[#allocation5 + $0x898] sm:$0xff]
    %v372 = vld [vmem:[#allocation5 + $0x8a0] sm:$0xff]
    %v373 = vld [vmem:[#allocation5 + $0x8a8] sm:$0xff]
    %v374 = vld [vmem:[#allocation5 + $0x8b0] sm:$0xff]
    %v375 = vld [vmem:[#allocation5 + $0x8b8] sm:$0xff]
    %v376 = vld [vmem:[#allocation5 + $0x8c0] sm:$0xff]
    %v377 = vld [vmem:[#allocation5 + $0x8c8] sm:$0xff]
    %v378 = vld [vmem:[#allocation5 + $0x8d0] sm:$0xff]
    %v379 = vld [vmem:[#allocation5 + $0x8d8] sm:$0xff]
    %v380 = vld [vmem:[#allocation5 + $0x8e0] sm:$0xff]
    %v381 = vld [vmem:[#allocation5 + $0x8e8] sm:$0xff]
    %v382 = vld [vmem:[#allocation5 + $0x8f0] sm:$0xff]
    %v383 = vld [vmem:[#allocation5 + $0x8f8] sm:$0xff]
    %v384 = vld [vmem:[#allocation5 + $0x900] sm:$0xff]
    %v385 = vld [vmem:[#allocation5 + $0x908] sm:$0xff]
    %v386 = vld [vmem:[#allocation5 + $0x910] sm:$0xff]
    %v387 = vld [vmem:[#allocation5 + $0x918] sm:$0xff]
    %v388 = vld [vmem:[#allocation5 + $0x920] sm:$0xff]
    %v389 = vld [vmem:[#allocation5 + $0x928] sm:$0xff]
    %v390 = vld [vmem:[#allocation5 + $0x930] sm:$0xff]
    %v391 = vld [vmem:[#allocation5 + $0x938] sm:$0xff]
    %v392 = vld [vmem:[#allocation5 + $0x940] sm:$0xff]
    %v393 = vld [vmem:[#allocation5 + $0x948] sm:$0xff]
    %v394 = vld [vmem:[#allocation5 + $0x950] sm:$0xff]
    %v395 = vld [vmem:[#allocation5 + $0x958] sm:$0xff]
    %v396 = vld [vmem:[#allocation5 + $0x960] sm:$0xff]
    %v397 = vld [vmem:[#allocation5 + $0x968] sm:$0xff]
    %v398 = vld [vmem:[#allocation5 + $0x970] sm:$0xff]
    %v399 = vld [vmem:[#allocation5 + $0x978] sm:$0xff]
    %v400 = vld [vmem:[#allocation5 + $0x980] sm:$0xff]
    %v401 = vld [vmem:[#allocation5 + $0x988] sm:$0xff]
    %v402 = vld [vmem:[#allocation5 + $0x990] sm:$0xff]
    %v403 = vld [vmem:[#allocation5 + $0x998] sm:$0xff]
    %v404 = vld [vmem:[#allocation5 + $0x9a0] sm:$0xff]
    %v405 = vld [vmem:[#allocation5 + $0x9a8] sm:$0xff]
    %v406 = vld [vmem:[#allocation5 + $0x9b0] sm:$0xff]
    %v407 = vld [vmem:[#allocation5 + $0x9b8] sm:$0xff]
    %v408 = vld [vmem:[#allocation5 + $0x9c0] sm:$0xff]
    %v409 = vld [vmem:[#allocation5 + $0x9c8] sm:$0xff]
    %v410 = vld [vmem:[#allocation5 + $0x9d0] sm:$0xff]
    %v411 = vld [vmem:[#allocation5 + $0x9d8] sm:$0xff]
    %v412 = vld [vmem:[#allocation5 + $0x9e0] sm:$0xff]
    %v413 = vld [vmem:[#allocation5 + $0x9e8] sm:$0xff]
    %v414 = vld [vmem:[#allocation5 + $0x9f0] sm:$0xff]
    %v415 = vld [vmem:[#allocation5 + $0x9f8] sm:$0xff]
    %v416 = vld [vmem:[#allocation5 + $0xa00] sm:$0xff]
    %v417 = vld [vmem:[#allocation5 + $0xa08] sm:$0xff]
    %v418 = vld [vmem:[#allocation5 + $0xa10] sm:$0xff]
    %v419 = vld [vmem:[#allocation5 + $0xa18] sm:$0xff]
    %v420 = vld [vmem:[#allocation5 + $0xa20] sm:$0xff]
    %v421 = vld [vmem:[#allocation5 + $0xa28] sm:$0xff]
    %v422 = vld [vmem:[#allocation5 + $0xa30] sm:$0xff]
    %v423 = vld [vmem:[#allocation5 + $0xa38] sm:$0xff]
    %v424 = vld [vmem:[#allocation5 + $0xa40] sm:$0xff]
    %v425 = vld [vmem:[#allocation5 + $0xa48] sm:$0xff]
    %v426 = vld [vmem:[#allocation5 + $0xa50] sm:$0xff]
    %v427 = vld [vmem:[#allocation5 + $0xa58] sm:$0xff]
    %v428 = vld [vmem:[#allocation5 + $0xa60] sm:$0xff]
    %v429 = vld [vmem:[#allocation5 + $0xa68] sm:$0xff]
    %v430 = vld [vmem:[#allocation5 + $0xa70] sm:$0xff]
    %v431 = vld [vmem:[#allocation5 + $0xa78] sm:$0xff]
    %v432 = vld [vmem:[#allocation5 + $0xa80] sm:$0xff]
    %v433 = vld [vmem:[#allocation5 + $0xa88] sm:$0xff]
    %v434 = vld [vmem:[#allocation5 + $0xa90] sm:$0xff]
    %v435 = vld [vmem:[#allocation5 + $0xa98] sm:$0xff]
    %v436 = vld [vmem:[#allocation5 + $0xaa0] sm:$0xff]
    %v437 = vld [vmem:[#allocation5 + $0xaa8] sm:$0xff]
    %v438 = vld [vmem:[#allocation5 + $0xab0] sm:$0xff]
    %v439 = vld [vmem:[#allocation5 + $0xab8] sm:$0xff]
    %v440 = vld [vmem:[#allocation5 + $0xac0] sm:$0xff]
    %v441 = vld [vmem:[#allocation5 + $0xac8] sm:$0xff]
    %v442 = vld [vmem:[#allocation5 + $0xad0] sm:$0xff]
    %v443 = vld [vmem:[#allocation5 + $0xad8] sm:$0xff]
    %v444 = vld [vmem:[#allocation5 + $0xae0] sm:$0xff]
    %v445 = vld [vmem:[#allocation5 + $0xae8] sm:$0xff]
    %v446 = vld [vmem:[#allocation5 + $0xaf0] sm:$0xff]
    %v447 = vld [vmem:[#allocation5 + $0xaf8] sm:$0xff]
    %v448 = vld [vmem:[#allocation5 + $0xb00] sm:$0xff]
    %v449 = vld [vmem:[#allocation5 + $0xb08] sm:$0xff]
    %v450 = vld [vmem:[#allocation5 + $0xb10] sm:$0xff]
    %v451 = vld [vmem:[#allocation5 + $0xb18] sm:$0xff]
    %v452 = vld [vmem:[#allocation5 + $0xb20] sm:$0xff]
    %v453 = vld [vmem:[#allocation5 + $0xb28] sm:$0xff]
    %v454 = vld [vmem:[#allocation5 + $0xb30] sm:$0xff]
    %v455 = vld [vmem:[#allocation5 + $0xb38] sm:$0xff]
    %v456 = vld [vmem:[#allocation5 + $0xb40] sm:$0xff]
    %v457 = vld [vmem:[#allocation5 + $0xb48] sm:$0xff]
    %v458 = vld [vmem:[#allocation5 + $0xb50] sm:$0xff]
    %v459 = vld [vmem:[#allocation5 + $0xb58] sm:$0xff]
    %v460 = vld [vmem:[#allocation5 + $0xb60] sm:$0xff]
    %v461 = vld [vmem:[#allocation5 + $0xb68] sm:$0xff]
    %v462 = vld [vmem:[#allocation5 + $0xb70] sm:$0xff]
    %v463 = vld [vmem:[#allocation5 + $0xb78] sm:$0xff]
    %v464 = vld [vmem:[#allocation5 + $0xb80] sm:$0xff]
    %v465 = vld [vmem:[#allocation5 + $0xb88] sm:$0xff]
    %v466 = vld [vmem:[#allocation5 + $0xb90] sm:$0xff]
    %v467 = vld [vmem:[#allocation5 + $0xb98] sm:$0xff]
    %v468 = vld [vmem:[#allocation5 + $0xba0] sm:$0xff]
    %v469 = vld [vmem:[#allocation5 + $0xba8] sm:$0xff]
    %v470 = vld [vmem:[#allocation5 + $0xbb0] sm:$0xff]
    %v471 = vld [vmem:[#allocation5 + $0xbb8] sm:$0xff]
    %v472 = vld [vmem:[#allocation5 + $0xbc0] sm:$0xff]
    %v473 = vld [vmem:[#allocation5 + $0xbc8] sm:$0xff]
    %v474 = vld [vmem:[#allocation5 + $0xbd0] sm:$0xff]
    %v475 = vld [vmem:[#allocation5 + $0xbd8] sm:$0xff]
    %v476 = vld [vmem:[#allocation5 + $0xbe0] sm:$0xff]
    %v477 = vld [vmem:[#allocation5 + $0xbe8] sm:$0xff]
    %v478 = vld [vmem:[#allocation5 + $0xbf0] sm:$0xff]
    %v479 = vld [vmem:[#allocation5 + $0xbf8] sm:$0xff]
    %v480 = vld [vmem:[#allocation7] sm:$0x3]
    %v482 = vlaneseq
    %v483 = vshrl.u32 %v482, 7
    %v484 = vsub.s32 0, %v483
    %v485 = vrot.slane %v480, %v484
    %v486 = vlaneseq
    %v487 = vshrl.u32 %v486, 7
    %v488 = vsub.s32 1, %v487
    %v489 = vrot.slane %v480, %v488
    %v504 = vunpack.c.l.b16 %v84
    %v505 = vunpack.c.h.b16 %v84
    %v506 = vunpack.c.l.b16 %v85
    %v507 = vunpack.c.h.b16 %v85
    %v508 = vunpack.c.l.b16 %v86
    %v509 = vunpack.c.h.b16 %v86
    %v510 = vunpack.c.l.b16 %v87
    %v511 = vunpack.c.h.b16 %v87
    %v512 = vunpack.c.l.b16 %v88
    %v513 = vunpack.c.h.b16 %v88
    %v514 = vunpack.c.l.b16 %v89
    %v515 = vunpack.c.h.b16 %v89
    %v516 = vunpack.c.l.b16 %v90
    %v517 = vunpack.c.h.b16 %v90
    %v518 = vunpack.c.l.b16 %v91
    %v519 = vunpack.c.h.b16 %v91
    %v520 = vunpack.c.l.b16 %v92
    %v521 = vunpack.c.h.b16 %v92
    %v522 = vunpack.c.l.b16 %v93
    %v523 = vunpack.c.h.b16 %v93
    %v524 = vunpack.c.l.b16 %v94
    %v525 = vunpack.c.h.b16 %v94
    %v526 = vunpack.c.l.b16 %v95
    %v527 = vunpack.c.h.b16 %v95
    %v528 = vpack.c.b16 %v504, %v504
    %v529 = vpack.c.b16 %v505, %v505
    %v530 = vpack.c.b16 %v506, %v506
    %v531 = vpack.c.b16 %v507, %v507
    %v532 = vpack.c.b16 %v508, %v508
    %v533 = vpack.c.b16 %v509, %v509
    %v534 = vpack.c.b16 %v510, %v510
    %v535 = vpack.c.b16 %v511, %v511
    %v536 = vpack.c.b16 %v512, %v512
    %v537 = vpack.c.b16 %v513, %v513
    %v538 = vpack.c.b16 %v514, %v514
    %v539 = vpack.c.b16 %v515, %v515
    %v540 = vpack.c.b16 %v516, %v516
    %v541 = vpack.c.b16 %v517, %v517
    %v542 = vpack.c.b16 %v518, %v518
    %v543 = vpack.c.b16 %v519, %v519
    %v544 = vpack.c.b16 %v520, %v520
    %v545 = vpack.c.b16 %v521, %v521
    %v546 = vpack.c.b16 %v522, %v522
    %v547 = vpack.c.b16 %v523, %v523
    %v548 = vpack.c.b16 %v524, %v524
    %v549 = vpack.c.b16 %v525, %v525
    %v550 = vpack.c.b16 %v526, %v526
    %v551 = vpack.c.b16 %v527, %v527
    %v960 = vunpack.c.l.b16 %v96
    %v961 = vunpack.c.h.b16 %v96
    %v962 = vunpack.c.l.b16 %v97
    %v963 = vunpack.c.h.b16 %v97
    %v964 = vunpack.c.l.b16 %v98
    %v965 = vunpack.c.h.b16 %v98
    %v966 = vunpack.c.l.b16 %v99
    %v967 = vunpack.c.h.b16 %v99
    %v968 = vunpack.c.l.b16 %v100
    %v969 = vunpack.c.h.b16 %v100
    %v970 = vunpack.c.l.b16 %v101
    %v971 = vunpack.c.h.b16 %v101
    %v972 = vunpack.c.l.b16 %v102
    %v973 = vunpack.c.h.b16 %v102
    %v974 = vunpack.c.l.b16 %v103
    %v975 = vunpack.c.h.b16 %v103
    %v976 = vunpack.c.l.b16 %v104
    %v977 = vunpack.c.h.b16 %v104
    %v978 = vunpack.c.l.b16 %v105
    %v979 = vunpack.c.h.b16 %v105
    %v980 = vunpack.c.l.b16 %v106
    %v981 = vunpack.c.h.b16 %v106
    %v982 = vunpack.c.l.b16 %v107
    %v983 = vunpack.c.h.b16 %v107
    %v984 = vunpack.c.l.b16 %v108
    %v985 = vunpack.c.h.b16 %v108
    %v986 = vunpack.c.l.b16 %v109
    %v987 = vunpack.c.h.b16 %v109
    %v988 = vunpack.c.l.b16 %v110
    %v989 = vunpack.c.h.b16 %v110
    %v990 = vunpack.c.l.b16 %v111
    %v991 = vunpack.c.h.b16 %v111
    %v992 = vunpack.c.l.b16 %v112
    %v993 = vunpack.c.h.b16 %v112
    %v994 = vunpack.c.l.b16 %v113
    %v995 = vunpack.c.h.b16 %v113
    %v996 = vunpack.c.l.b16 %v114
    %v997 = vunpack.c.h.b16 %v114
    %v998 = vunpack.c.l.b16 %v115
    %v999 = vunpack.c.h.b16 %v115
    %v1000 = vunpack.c.l.b16 %v116
    %v1001 = vunpack.c.h.b16 %v116
    %v1002 = vunpack.c.l.b16 %v117
    %v1003 = vunpack.c.h.b16 %v117
    %v1004 = vunpack.c.l.b16 %v118
    %v1005 = vunpack.c.h.b16 %v118
    %v1006 = vunpack.c.l.b16 %v119
    %v1007 = vunpack.c.h.b16 %v119
    %v1008 = vunpack.c.l.b16 %v120
    %v1009 = vunpack.c.h.b16 %v120
    %v1010 = vunpack.c.l.b16 %v121
    %v1011 = vunpack.c.h.b16 %v121
    %v1012 = vunpack.c.l.b16 %v122
    %v1013 = vunpack.c.h.b16 %v122
    %v1014 = vunpack.c.l.b16 %v123
    %v1015 = vunpack.c.h.b16 %v123
    %v1016 = vunpack.c.l.b16 %v124
    %v1017 = vunpack.c.h.b16 %v124
    %v1018 = vunpack.c.l.b16 %v125
    %v1019 = vunpack.c.h.b16 %v125
    %v1020 = vunpack.c.l.b16 %v126
    %v1021 = vunpack.c.h.b16 %v126
    %v1022 = vunpack.c.l.b16 %v127
    %v1023 = vunpack.c.h.b16 %v127
    %v1024 = vunpack.c.l.b16 %v128
    %v1025 = vunpack.c.h.b16 %v128
    %v1026 = vunpack.c.l.b16 %v129
    %v1027 = vunpack.c.h.b16 %v129
    %v1028 = vunpack.c.l.b16 %v130
    %v1029 = vunpack.c.h.b16 %v130
    %v1030 = vunpack.c.l.b16 %v131
    %v1031 = vunpack.c.h.b16 %v131
    %v1032 = vunpack.c.l.b16 %v132
    %v1033 = vunpack.c.h.b16 %v132
    %v1034 = vunpack.c.l.b16 %v133
    %v1035 = vunpack.c.h.b16 %v133
    %v1036 = vunpack.c.l.b16 %v134
    %v1037 = vunpack.c.h.b16 %v134
    %v1038 = vunpack.c.l.b16 %v135
    %v1039 = vunpack.c.h.b16 %v135
    %v1040 = vunpack.c.l.b16 %v136
    %v1041 = vunpack.c.h.b16 %v136
    %v1042 = vunpack.c.l.b16 %v137
    %v1043 = vunpack.c.h.b16 %v137
    %v1044 = vunpack.c.l.b16 %v138
    %v1045 = vunpack.c.h.b16 %v138
    %v1046 = vunpack.c.l.b16 %v139
    %v1047 = vunpack.c.h.b16 %v139
    %v1048 = vunpack.c.l.b16 %v140
    %v1049 = vunpack.c.h.b16 %v140
    %v1050 = vunpack.c.l.b16 %v141
    %v1051 = vunpack.c.h.b16 %v141
    %v1052 = vunpack.c.l.b16 %v142
    %v1053 = vunpack.c.h.b16 %v142
    %v1054 = vunpack.c.l.b16 %v143
    %v1055 = vunpack.c.h.b16 %v143
    %v1056 = vunpack.c.l.b16 %v144
    %v1057 = vunpack.c.h.b16 %v144
    %v1058 = vunpack.c.l.b16 %v145
    %v1059 = vunpack.c.h.b16 %v145
    %v1060 = vunpack.c.l.b16 %v146
    %v1061 = vunpack.c.h.b16 %v146
    %v1062 = vunpack.c.l.b16 %v147
    %v1063 = vunpack.c.h.b16 %v147
    %v1064 = vunpack.c.l.b16 %v148
    %v1065 = vunpack.c.h.b16 %v148
    %v1066 = vunpack.c.l.b16 %v149
    %v1067 = vunpack.c.h.b16 %v149
    %v1068 = vunpack.c.l.b16 %v150
    %v1069 = vunpack.c.h.b16 %v150
    %v1070 = vunpack.c.l.b16 %v151
    %v1071 = vunpack.c.h.b16 %v151
    %v1072 = vunpack.c.l.b16 %v152
    %v1073 = vunpack.c.h.b16 %v152
    %v1074 = vunpack.c.l.b16 %v153
    %v1075 = vunpack.c.h.b16 %v153
    %v1076 = vunpack.c.l.b16 %v154
    %v1077 = vunpack.c.h.b16 %v154
    %v1078 = vunpack.c.l.b16 %v155
    %v1079 = vunpack.c.h.b16 %v155
    %v1080 = vunpack.c.l.b16 %v156
    %v1081 = vunpack.c.h.b16 %v156
    %v1082 = vunpack.c.l.b16 %v157
    %v1083 = vunpack.c.h.b16 %v157
    %v1084 = vunpack.c.l.b16 %v158
    %v1085 = vunpack.c.h.b16 %v158
    %v1086 = vunpack.c.l.b16 %v159
    %v1087 = vunpack.c.h.b16 %v159
    %v1088 = vunpack.c.l.b16 %v160
    %v1089 = vunpack.c.h.b16 %v160
    %v1090 = vunpack.c.l.b16 %v161
    %v1091 = vunpack.c.h.b16 %v161
    %v1092 = vunpack.c.l.b16 %v162
    %v1093 = vunpack.c.h.b16 %v162
    %v1094 = vunpack.c.l.b16 %v163
    %v1095 = vunpack.c.h.b16 %v163
    %v1096 = vunpack.c.l.b16 %v164
    %v1097 = vunpack.c.h.b16 %v164
    %v1098 = vunpack.c.l.b16 %v165
    %v1099 = vunpack.c.h.b16 %v165
    %v1100 = vunpack.c.l.b16 %v166
    %v1101 = vunpack.c.h.b16 %v166
    %v1102 = vunpack.c.l.b16 %v167
    %v1103 = vunpack.c.h.b16 %v167
    %v1104 = vunpack.c.l.b16 %v168
    %v1105 = vunpack.c.h.b16 %v168
    %v1106 = vunpack.c.l.b16 %v169
    %v1107 = vunpack.c.h.b16 %v169
    %v1108 = vunpack.c.l.b16 %v170
    %v1109 = vunpack.c.h.b16 %v170
    %v1110 = vunpack.c.l.b16 %v171
    %v1111 = vunpack.c.h.b16 %v171
    %v1112 = vunpack.c.l.b16 %v172
    %v1113 = vunpack.c.h.b16 %v172
    %v1114 = vunpack.c.l.b16 %v173
    %v1115 = vunpack.c.h.b16 %v173
    %v1116 = vunpack.c.l.b16 %v174
    %v1117 = vunpack.c.h.b16 %v174
    %v1118 = vunpack.c.l.b16 %v175
    %v1119 = vunpack.c.h.b16 %v175
    %v1120 = vunpack.c.l.b16 %v176
    %v1121 = vunpack.c.h.b16 %v176
    %v1122 = vunpack.c.l.b16 %v177
    %v1123 = vunpack.c.h.b16 %v177
    %v1124 = vunpack.c.l.b16 %v178
    %v1125 = vunpack.c.h.b16 %v178
    %v1126 = vunpack.c.l.b16 %v179
    %v1127 = vunpack.c.h.b16 %v179
    %v1128 = vunpack.c.l.b16 %v180
    %v1129 = vunpack.c.h.b16 %v180
    %v1130 = vunpack.c.l.b16 %v181
    %v1131 = vunpack.c.h.b16 %v181
    %v1132 = vunpack.c.l.b16 %v182
    %v1133 = vunpack.c.h.b16 %v182
    %v1134 = vunpack.c.l.b16 %v183
    %v1135 = vunpack.c.h.b16 %v183
    %v1136 = vunpack.c.l.b16 %v184
    %v1137 = vunpack.c.h.b16 %v184
    %v1138 = vunpack.c.l.b16 %v185
    %v1139 = vunpack.c.h.b16 %v185
    %v1140 = vunpack.c.l.b16 %v186
    %v1141 = vunpack.c.h.b16 %v186
    %v1142 = vunpack.c.l.b16 %v187
    %v1143 = vunpack.c.h.b16 %v187
    %v1144 = vunpack.c.l.b16 %v188
    %v1145 = vunpack.c.h.b16 %v188
    %v1146 = vunpack.c.l.b16 %v189
    %v1147 = vunpack.c.h.b16 %v189
    %v1148 = vunpack.c.l.b16 %v190
    %v1149 = vunpack.c.h.b16 %v190
    %v1150 = vunpack.c.l.b16 %v191
    %v1151 = vunpack.c.h.b16 %v191
    %v1152 = vunpack.c.l.b16 %v192
    %v1153 = vunpack.c.h.b16 %v192
    %v1154 = vunpack.c.l.b16 %v193
    %v1155 = vunpack.c.h.b16 %v193
    %v1156 = vunpack.c.l.b16 %v194
    %v1157 = vunpack.c.h.b16 %v194
    %v1158 = vunpack.c.l.b16 %v195
    %v1159 = vunpack.c.h.b16 %v195
    %v1160 = vunpack.c.l.b16 %v196
    %v1161 = vunpack.c.h.b16 %v196
    %v1162 = vunpack.c.l.b16 %v197
    %v1163 = vunpack.c.h.b16 %v197
    %v1164 = vunpack.c.l.b16 %v198
    %v1165 = vunpack.c.h.b16 %v198
    %v1166 = vunpack.c.l.b16 %v199
    %v1167 = vunpack.c.h.b16 %v199
    %v1168 = vunpack.c.l.b16 %v200
    %v1169 = vunpack.c.h.b16 %v200
    %v1170 = vunpack.c.l.b16 %v201
    %v1171 = vunpack.c.h.b16 %v201
    %v1172 = vunpack.c.l.b16 %v202
    %v1173 = vunpack.c.h.b16 %v202
    %v1174 = vunpack.c.l.b16 %v203
    %v1175 = vunpack.c.h.b16 %v203
    %v1176 = vunpack.c.l.b16 %v204
    %v1177 = vunpack.c.h.b16 %v204
    %v1178 = vunpack.c.l.b16 %v205
    %v1179 = vunpack.c.h.b16 %v205
    %v1180 = vunpack.c.l.b16 %v206
    %v1181 = vunpack.c.h.b16 %v206
    %v1182 = vunpack.c.l.b16 %v207
    %v1183 = vunpack.c.h.b16 %v207
    %v1184 = vunpack.c.l.b16 %v208
    %v1185 = vunpack.c.h.b16 %v208
    %v1186 = vunpack.c.l.b16 %v209
    %v1187 = vunpack.c.h.b16 %v209
    %v1188 = vunpack.c.l.b16 %v210
    %v1189 = vunpack.c.h.b16 %v210
    %v1190 = vunpack.c.l.b16 %v211
    %v1191 = vunpack.c.h.b16 %v211
    %v1192 = vunpack.c.l.b16 %v212
    %v1193 = vunpack.c.h.b16 %v212
    %v1194 = vunpack.c.l.b16 %v213
    %v1195 = vunpack.c.h.b16 %v213
    %v1196 = vunpack.c.l.b16 %v214
    %v1197 = vunpack.c.h.b16 %v214
    %v1198 = vunpack.c.l.b16 %v215
    %v1199 = vunpack.c.h.b16 %v215
    %v1200 = vunpack.c.l.b16 %v216
    %v1201 = vunpack.c.h.b16 %v216
    %v1202 = vunpack.c.l.b16 %v217
    %v1203 = vunpack.c.h.b16 %v217
    %v1204 = vunpack.c.l.b16 %v218
    %v1205 = vunpack.c.h.b16 %v218
    %v1206 = vunpack.c.l.b16 %v219
    %v1207 = vunpack.c.h.b16 %v219
    %v1208 = vunpack.c.l.b16 %v220
    %v1209 = vunpack.c.h.b16 %v220
    %v1210 = vunpack.c.l.b16 %v221
    %v1211 = vunpack.c.h.b16 %v221
    %v1212 = vunpack.c.l.b16 %v222
    %v1213 = vunpack.c.h.b16 %v222
    %v1214 = vunpack.c.l.b16 %v223
    %v1215 = vunpack.c.h.b16 %v223
    %v1216 = vunpack.c.l.b16 %v224
    %v1217 = vunpack.c.h.b16 %v224
    %v1218 = vunpack.c.l.b16 %v225
    %v1219 = vunpack.c.h.b16 %v225
    %v1220 = vunpack.c.l.b16 %v226
    %v1221 = vunpack.c.h.b16 %v226
    %v1222 = vunpack.c.l.b16 %v227
    %v1223 = vunpack.c.h.b16 %v227
    %v1224 = vunpack.c.l.b16 %v228
    %v1225 = vunpack.c.h.b16 %v228
    %v1226 = vunpack.c.l.b16 %v229
    %v1227 = vunpack.c.h.b16 %v229
    %v1228 = vunpack.c.l.b16 %v230
    %v1229 = vunpack.c.h.b16 %v230
    %v1230 = vunpack.c.l.b16 %v231
    %v1231 = vunpack.c.h.b16 %v231
    %v1232 = vunpack.c.l.b16 %v232
    %v1233 = vunpack.c.h.b16 %v232
    %v1234 = vunpack.c.l.b16 %v233
    %v1235 = vunpack.c.h.b16 %v233
    %v1236 = vunpack.c.l.b16 %v234
    %v1237 = vunpack.c.h.b16 %v234
    %v1238 = vunpack.c.l.b16 %v235
    %v1239 = vunpack.c.h.b16 %v235
    %v1240 = vunpack.c.l.b16 %v236
    %v1241 = vunpack.c.h.b16 %v236
    %v1242 = vunpack.c.l.b16 %v237
    %v1243 = vunpack.c.h.b16 %v237
    %v1244 = vunpack.c.l.b16 %v238
    %v1245 = vunpack.c.h.b16 %v238
    %v1246 = vunpack.c.l.b16 %v239
    %v1247 = vunpack.c.h.b16 %v239
    %v1248 = vunpack.c.l.b16 %v240
    %v1249 = vunpack.c.h.b16 %v240
    %v1250 = vunpack.c.l.b16 %v241
    %v1251 = vunpack.c.h.b16 %v241
    %v1252 = vunpack.c.l.b16 %v242
    %v1253 = vunpack.c.h.b16 %v242
    %v1254 = vunpack.c.l.b16 %v243
    %v1255 = vunpack.c.h.b16 %v243
    %v1256 = vunpack.c.l.b16 %v244
    %v1257 = vunpack.c.h.b16 %v244
    %v1258 = vunpack.c.l.b16 %v245
    %v1259 = vunpack.c.h.b16 %v245
    %v1260 = vunpack.c.l.b16 %v246
    %v1261 = vunpack.c.h.b16 %v246
    %v1262 = vunpack.c.l.b16 %v247
    %v1263 = vunpack.c.h.b16 %v247
    %v1264 = vunpack.c.l.b16 %v248
    %v1265 = vunpack.c.h.b16 %v248
    %v1266 = vunpack.c.l.b16 %v249
    %v1267 = vunpack.c.h.b16 %v249
    %v1268 = vunpack.c.l.b16 %v250
    %v1269 = vunpack.c.h.b16 %v250
    %v1270 = vunpack.c.l.b16 %v251
    %v1271 = vunpack.c.h.b16 %v251
    %v1272 = vunpack.c.l.b16 %v252
    %v1273 = vunpack.c.h.b16 %v252
    %v1274 = vunpack.c.l.b16 %v253
    %v1275 = vunpack.c.h.b16 %v253
    %v1276 = vunpack.c.l.b16 %v254
    %v1277 = vunpack.c.h.b16 %v254
    %v1278 = vunpack.c.l.b16 %v255
    %v1279 = vunpack.c.h.b16 %v255
    %v1280 = vunpack.c.l.b16 %v256
    %v1281 = vunpack.c.h.b16 %v256
    %v1282 = vunpack.c.l.b16 %v257
    %v1283 = vunpack.c.h.b16 %v257
    %v1284 = vunpack.c.l.b16 %v258
    %v1285 = vunpack.c.h.b16 %v258
    %v1286 = vunpack.c.l.b16 %v259
    %v1287 = vunpack.c.h.b16 %v259
    %v1288 = vunpack.c.l.b16 %v260
    %v1289 = vunpack.c.h.b16 %v260
    %v1290 = vunpack.c.l.b16 %v261
    %v1291 = vunpack.c.h.b16 %v261
    %v1292 = vunpack.c.l.b16 %v262
    %v1293 = vunpack.c.h.b16 %v262
    %v1294 = vunpack.c.l.b16 %v263
    %v1295 = vunpack.c.h.b16 %v263
    %v1296 = vunpack.c.l.b16 %v264
    %v1297 = vunpack.c.h.b16 %v264
    %v1298 = vunpack.c.l.b16 %v265
    %v1299 = vunpack.c.h.b16 %v265
    %v1300 = vunpack.c.l.b16 %v266
    %v1301 = vunpack.c.h.b16 %v266
    %v1302 = vunpack.c.l.b16 %v267
    %v1303 = vunpack.c.h.b16 %v267
    %v1304 = vunpack.c.l.b16 %v268
    %v1305 = vunpack.c.h.b16 %v268
    %v1306 = vunpack.c.l.b16 %v269
    %v1307 = vunpack.c.h.b16 %v269
    %v1308 = vunpack.c.l.b16 %v270
    %v1309 = vunpack.c.h.b16 %v270
    %v1310 = vunpack.c.l.b16 %v271
    %v1311 = vunpack.c.h.b16 %v271
    %v1312 = vunpack.c.l.b16 %v272
    %v1313 = vunpack.c.h.b16 %v272
    %v1314 = vunpack.c.l.b16 %v273
    %v1315 = vunpack.c.h.b16 %v273
    %v1316 = vunpack.c.l.b16 %v274
    %v1317 = vunpack.c.h.b16 %v274
    %v1318 = vunpack.c.l.b16 %v275
    %v1319 = vunpack.c.h.b16 %v275
    %v1320 = vunpack.c.l.b16 %v276
    %v1321 = vunpack.c.h.b16 %v276
    %v1322 = vunpack.c.l.b16 %v277
    %v1323 = vunpack.c.h.b16 %v277
    %v1324 = vunpack.c.l.b16 %v278
    %v1325 = vunpack.c.h.b16 %v278
    %v1326 = vunpack.c.l.b16 %v279
    %v1327 = vunpack.c.h.b16 %v279
    %v1328 = vunpack.c.l.b16 %v280
    %v1329 = vunpack.c.h.b16 %v280
    %v1330 = vunpack.c.l.b16 %v281
    %v1331 = vunpack.c.h.b16 %v281
    %v1332 = vunpack.c.l.b16 %v282
    %v1333 = vunpack.c.h.b16 %v282
    %v1334 = vunpack.c.l.b16 %v283
    %v1335 = vunpack.c.h.b16 %v283
    %v1336 = vunpack.c.l.b16 %v284
    %v1337 = vunpack.c.h.b16 %v284
    %v1338 = vunpack.c.l.b16 %v285
    %v1339 = vunpack.c.h.b16 %v285
    %v1340 = vunpack.c.l.b16 %v286
    %v1341 = vunpack.c.h.b16 %v286
    %v1342 = vunpack.c.l.b16 %v287
    %v1343 = vunpack.c.h.b16 %v287
    %v1344 = vunpack.c.l.b16 %v288
    %v1345 = vunpack.c.h.b16 %v288
    %v1346 = vunpack.c.l.b16 %v289
    %v1347 = vunpack.c.h.b16 %v289
    %v1348 = vunpack.c.l.b16 %v290
    %v1349 = vunpack.c.h.b16 %v290
    %v1350 = vunpack.c.l.b16 %v291
    %v1351 = vunpack.c.h.b16 %v291
    %v1352 = vunpack.c.l.b16 %v292
    %v1353 = vunpack.c.h.b16 %v292
    %v1354 = vunpack.c.l.b16 %v293
    %v1355 = vunpack.c.h.b16 %v293
    %v1356 = vunpack.c.l.b16 %v294
    %v1357 = vunpack.c.h.b16 %v294
    %v1358 = vunpack.c.l.b16 %v295
    %v1359 = vunpack.c.h.b16 %v295
    %v1360 = vunpack.c.l.b16 %v296
    %v1361 = vunpack.c.h.b16 %v296
    %v1362 = vunpack.c.l.b16 %v297
    %v1363 = vunpack.c.h.b16 %v297
    %v1364 = vunpack.c.l.b16 %v298
    %v1365 = vunpack.c.h.b16 %v298
    %v1366 = vunpack.c.l.b16 %v299
    %v1367 = vunpack.c.h.b16 %v299
    %v1368 = vunpack.c.l.b16 %v300
    %v1369 = vunpack.c.h.b16 %v300
    %v1370 = vunpack.c.l.b16 %v301
    %v1371 = vunpack.c.h.b16 %v301
    %v1372 = vunpack.c.l.b16 %v302
    %v1373 = vunpack.c.h.b16 %v302
    %v1374 = vunpack.c.l.b16 %v303
    %v1375 = vunpack.c.h.b16 %v303
    %v1376 = vunpack.c.l.b16 %v304
    %v1377 = vunpack.c.h.b16 %v304
    %v1378 = vunpack.c.l.b16 %v305
    %v1379 = vunpack.c.h.b16 %v305
    %v1380 = vunpack.c.l.b16 %v306
    %v1381 = vunpack.c.h.b16 %v306
    %v1382 = vunpack.c.l.b16 %v307
    %v1383 = vunpack.c.h.b16 %v307
    %v1384 = vunpack.c.l.b16 %v308
    %v1385 = vunpack.c.h.b16 %v308
    %v1386 = vunpack.c.l.b16 %v309
    %v1387 = vunpack.c.h.b16 %v309
    %v1388 = vunpack.c.l.b16 %v310
    %v1389 = vunpack.c.h.b16 %v310
    %v1390 = vunpack.c.l.b16 %v311
    %v1391 = vunpack.c.h.b16 %v311
    %v1392 = vunpack.c.l.b16 %v312
    %v1393 = vunpack.c.h.b16 %v312
    %v1394 = vunpack.c.l.b16 %v313
    %v1395 = vunpack.c.h.b16 %v313
    %v1396 = vunpack.c.l.b16 %v314
    %v1397 = vunpack.c.h.b16 %v314
    %v1398 = vunpack.c.l.b16 %v315
    %v1399 = vunpack.c.h.b16 %v315
    %v1400 = vunpack.c.l.b16 %v316
    %v1401 = vunpack.c.h.b16 %v316
    %v1402 = vunpack.c.l.b16 %v317
    %v1403 = vunpack.c.h.b16 %v317
    %v1404 = vunpack.c.l.b16 %v318
    %v1405 = vunpack.c.h.b16 %v318
    %v1406 = vunpack.c.l.b16 %v319
    %v1407 = vunpack.c.h.b16 %v319
    %v1408 = vunpack.c.l.b16 %v320
    %v1409 = vunpack.c.h.b16 %v320
    %v1410 = vunpack.c.l.b16 %v321
    %v1411 = vunpack.c.h.b16 %v321
    %v1412 = vunpack.c.l.b16 %v322
    %v1413 = vunpack.c.h.b16 %v322
    %v1414 = vunpack.c.l.b16 %v323
    %v1415 = vunpack.c.h.b16 %v323
    %v1416 = vunpack.c.l.b16 %v324
    %v1417 = vunpack.c.h.b16 %v324
    %v1418 = vunpack.c.l.b16 %v325
    %v1419 = vunpack.c.h.b16 %v325
    %v1420 = vunpack.c.l.b16 %v326
    %v1421 = vunpack.c.h.b16 %v326
    %v1422 = vunpack.c.l.b16 %v327
    %v1423 = vunpack.c.h.b16 %v327
    %v1424 = vunpack.c.l.b16 %v328
    %v1425 = vunpack.c.h.b16 %v328
    %v1426 = vunpack.c.l.b16 %v329
    %v1427 = vunpack.c.h.b16 %v329
    %v1428 = vunpack.c.l.b16 %v330
    %v1429 = vunpack.c.h.b16 %v330
    %v1430 = vunpack.c.l.b16 %v331
    %v1431 = vunpack.c.h.b16 %v331
    %v1432 = vunpack.c.l.b16 %v332
    %v1433 = vunpack.c.h.b16 %v332
    %v1434 = vunpack.c.l.b16 %v333
    %v1435 = vunpack.c.h.b16 %v333
    %v1436 = vunpack.c.l.b16 %v334
    %v1437 = vunpack.c.h.b16 %v334
    %v1438 = vunpack.c.l.b16 %v335
    %v1439 = vunpack.c.h.b16 %v335
    %v1440 = vunpack.c.l.b16 %v336
    %v1441 = vunpack.c.h.b16 %v336
    %v1442 = vunpack.c.l.b16 %v337
    %v1443 = vunpack.c.h.b16 %v337
    %v1444 = vunpack.c.l.b16 %v338
    %v1445 = vunpack.c.h.b16 %v338
    %v1446 = vunpack.c.l.b16 %v339
    %v1447 = vunpack.c.h.b16 %v339
    %v1448 = vunpack.c.l.b16 %v340
    %v1449 = vunpack.c.h.b16 %v340
    %v1450 = vunpack.c.l.b16 %v341
    %v1451 = vunpack.c.h.b16 %v341
    %v1452 = vunpack.c.l.b16 %v342
    %v1453 = vunpack.c.h.b16 %v342
    %v1454 = vunpack.c.l.b16 %v343
    %v1455 = vunpack.c.h.b16 %v343
    %v1456 = vunpack.c.l.b16 %v344
    %v1457 = vunpack.c.h.b16 %v344
    %v1458 = vunpack.c.l.b16 %v345
    %v1459 = vunpack.c.h.b16 %v345
    %v1460 = vunpack.c.l.b16 %v346
    %v1461 = vunpack.c.h.b16 %v346
    %v1462 = vunpack.c.l.b16 %v347
    %v1463 = vunpack.c.h.b16 %v347
    %v1464 = vunpack.c.l.b16 %v348
    %v1465 = vunpack.c.h.b16 %v348
    %v1466 = vunpack.c.l.b16 %v349
    %v1467 = vunpack.c.h.b16 %v349
    %v1468 = vunpack.c.l.b16 %v350
    %v1469 = vunpack.c.h.b16 %v350
    %v1470 = vunpack.c.l.b16 %v351
    %v1471 = vunpack.c.h.b16 %v351
    %v1472 = vunpack.c.l.b16 %v352
    %v1473 = vunpack.c.h.b16 %v352
    %v1474 = vunpack.c.l.b16 %v353
    %v1475 = vunpack.c.h.b16 %v353
    %v1476 = vunpack.c.l.b16 %v354
    %v1477 = vunpack.c.h.b16 %v354
    %v1478 = vunpack.c.l.b16 %v355
    %v1479 = vunpack.c.h.b16 %v355
    %v1480 = vunpack.c.l.b16 %v356
    %v1481 = vunpack.c.h.b16 %v356
    %v1482 = vunpack.c.l.b16 %v357
    %v1483 = vunpack.c.h.b16 %v357
    %v1484 = vunpack.c.l.b16 %v358
    %v1485 = vunpack.c.h.b16 %v358
    %v1486 = vunpack.c.l.b16 %v359
    %v1487 = vunpack.c.h.b16 %v359
    %v1488 = vunpack.c.l.b16 %v360
    %v1489 = vunpack.c.h.b16 %v360
    %v1490 = vunpack.c.l.b16 %v361
    %v1491 = vunpack.c.h.b16 %v361
    %v1492 = vunpack.c.l.b16 %v362
    %v1493 = vunpack.c.h.b16 %v362
    %v1494 = vunpack.c.l.b16 %v363
    %v1495 = vunpack.c.h.b16 %v363
    %v1496 = vunpack.c.l.b16 %v364
    %v1497 = vunpack.c.h.b16 %v364
    %v1498 = vunpack.c.l.b16 %v365
    %v1499 = vunpack.c.h.b16 %v365
    %v1500 = vunpack.c.l.b16 %v366
    %v1501 = vunpack.c.h.b16 %v366
    %v1502 = vunpack.c.l.b16 %v367
    %v1503 = vunpack.c.h.b16 %v367
    %v1504 = vunpack.c.l.b16 %v368
    %v1505 = vunpack.c.h.b16 %v368
    %v1506 = vunpack.c.l.b16 %v369
    %v1507 = vunpack.c.h.b16 %v369
    %v1508 = vunpack.c.l.b16 %v370
    %v1509 = vunpack.c.h.b16 %v370
    %v1510 = vunpack.c.l.b16 %v371
    %v1511 = vunpack.c.h.b16 %v371
    %v1512 = vunpack.c.l.b16 %v372
    %v1513 = vunpack.c.h.b16 %v372
    %v1514 = vunpack.c.l.b16 %v373
    %v1515 = vunpack.c.h.b16 %v373
    %v1516 = vunpack.c.l.b16 %v374
    %v1517 = vunpack.c.h.b16 %v374
    %v1518 = vunpack.c.l.b16 %v375
    %v1519 = vunpack.c.h.b16 %v375
    %v1520 = vunpack.c.l.b16 %v376
    %v1521 = vunpack.c.h.b16 %v376
    %v1522 = vunpack.c.l.b16 %v377
    %v1523 = vunpack.c.h.b16 %v377
    %v1524 = vunpack.c.l.b16 %v378
    %v1525 = vunpack.c.h.b16 %v378
    %v1526 = vunpack.c.l.b16 %v379
    %v1527 = vunpack.c.h.b16 %v379
    %v1528 = vunpack.c.l.b16 %v380
    %v1529 = vunpack.c.h.b16 %v380
    %v1530 = vunpack.c.l.b16 %v381
    %v1531 = vunpack.c.h.b16 %v381
    %v1532 = vunpack.c.l.b16 %v382
    %v1533 = vunpack.c.h.b16 %v382
    %v1534 = vunpack.c.l.b16 %v383
    %v1535 = vunpack.c.h.b16 %v383
    %v1536 = vunpack.c.l.b16 %v384
    %v1537 = vunpack.c.h.b16 %v384
    %v1538 = vunpack.c.l.b16 %v385
    %v1539 = vunpack.c.h.b16 %v385
    %v1540 = vunpack.c.l.b16 %v386
    %v1541 = vunpack.c.h.b16 %v386
    %v1542 = vunpack.c.l.b16 %v387
    %v1543 = vunpack.c.h.b16 %v387
    %v1544 = vunpack.c.l.b16 %v388
    %v1545 = vunpack.c.h.b16 %v388
    %v1546 = vunpack.c.l.b16 %v389
    %v1547 = vunpack.c.h.b16 %v389
    %v1548 = vunpack.c.l.b16 %v390
    %v1549 = vunpack.c.h.b16 %v390
    %v1550 = vunpack.c.l.b16 %v391
    %v1551 = vunpack.c.h.b16 %v391
    %v1552 = vunpack.c.l.b16 %v392
    %v1553 = vunpack.c.h.b16 %v392
    %v1554 = vunpack.c.l.b16 %v393
    %v1555 = vunpack.c.h.b16 %v393
    %v1556 = vunpack.c.l.b16 %v394
    %v1557 = vunpack.c.h.b16 %v394
    %v1558 = vunpack.c.l.b16 %v395
    %v1559 = vunpack.c.h.b16 %v395
    %v1560 = vunpack.c.l.b16 %v396
    %v1561 = vunpack.c.h.b16 %v396
    %v1562 = vunpack.c.l.b16 %v397
    %v1563 = vunpack.c.h.b16 %v397
    %v1564 = vunpack.c.l.b16 %v398
    %v1565 = vunpack.c.h.b16 %v398
    %v1566 = vunpack.c.l.b16 %v399
    %v1567 = vunpack.c.h.b16 %v399
    %v1568 = vunpack.c.l.b16 %v400
    %v1569 = vunpack.c.h.b16 %v400
    %v1570 = vunpack.c.l.b16 %v401
    %v1571 = vunpack.c.h.b16 %v401
    %v1572 = vunpack.c.l.b16 %v402
    %v1573 = vunpack.c.h.b16 %v402
    %v1574 = vunpack.c.l.b16 %v403
    %v1575 = vunpack.c.h.b16 %v403
    %v1576 = vunpack.c.l.b16 %v404
    %v1577 = vunpack.c.h.b16 %v404
    %v1578 = vunpack.c.l.b16 %v405
    %v1579 = vunpack.c.h.b16 %v405
    %v1580 = vunpack.c.l.b16 %v406
    %v1581 = vunpack.c.h.b16 %v406
    %v1582 = vunpack.c.l.b16 %v407
    %v1583 = vunpack.c.h.b16 %v407
    %v1584 = vunpack.c.l.b16 %v408
    %v1585 = vunpack.c.h.b16 %v408
    %v1586 = vunpack.c.l.b16 %v409
    %v1587 = vunpack.c.h.b16 %v409
    %v1588 = vunpack.c.l.b16 %v410
    %v1589 = vunpack.c.h.b16 %v410
    %v1590 = vunpack.c.l.b16 %v411
    %v1591 = vunpack.c.h.b16 %v411
    %v1592 = vunpack.c.l.b16 %v412
    %v1593 = vunpack.c.h.b16 %v412
    %v1594 = vunpack.c.l.b16 %v413
    %v1595 = vunpack.c.h.b16 %v413
    %v1596 = vunpack.c.l.b16 %v414
    %v1597 = vunpack.c.h.b16 %v414
    %v1598 = vunpack.c.l.b16 %v415
    %v1599 = vunpack.c.h.b16 %v415
    %v1600 = vunpack.c.l.b16 %v416
    %v1601 = vunpack.c.h.b16 %v416
    %v1602 = vunpack.c.l.b16 %v417
    %v1603 = vunpack.c.h.b16 %v417
    %v1604 = vunpack.c.l.b16 %v418
    %v1605 = vunpack.c.h.b16 %v418
    %v1606 = vunpack.c.l.b16 %v419
    %v1607 = vunpack.c.h.b16 %v419
    %v1608 = vunpack.c.l.b16 %v420
    %v1609 = vunpack.c.h.b16 %v420
    %v1610 = vunpack.c.l.b16 %v421
    %v1611 = vunpack.c.h.b16 %v421
    %v1612 = vunpack.c.l.b16 %v422
    %v1613 = vunpack.c.h.b16 %v422
    %v1614 = vunpack.c.l.b16 %v423
    %v1615 = vunpack.c.h.b16 %v423
    %v1616 = vunpack.c.l.b16 %v424
    %v1617 = vunpack.c.h.b16 %v424
    %v1618 = vunpack.c.l.b16 %v425
    %v1619 = vunpack.c.h.b16 %v425
    %v1620 = vunpack.c.l.b16 %v426
    %v1621 = vunpack.c.h.b16 %v426
    %v1622 = vunpack.c.l.b16 %v427
    %v1623 = vunpack.c.h.b16 %v427
    %v1624 = vunpack.c.l.b16 %v428
    %v1625 = vunpack.c.h.b16 %v428
    %v1626 = vunpack.c.l.b16 %v429
    %v1627 = vunpack.c.h.b16 %v429
    %v1628 = vunpack.c.l.b16 %v430
    %v1629 = vunpack.c.h.b16 %v430
    %v1630 = vunpack.c.l.b16 %v431
    %v1631 = vunpack.c.h.b16 %v431
    %v1632 = vunpack.c.l.b16 %v432
    %v1633 = vunpack.c.h.b16 %v432
    %v1634 = vunpack.c.l.b16 %v433
    %v1635 = vunpack.c.h.b16 %v433
    %v1636 = vunpack.c.l.b16 %v434
    %v1637 = vunpack.c.h.b16 %v434
    %v1638 = vunpack.c.l.b16 %v435
    %v1639 = vunpack.c.h.b16 %v435
    %v1640 = vunpack.c.l.b16 %v436
    %v1641 = vunpack.c.h.b16 %v436
    %v1642 = vunpack.c.l.b16 %v437
    %v1643 = vunpack.c.h.b16 %v437
    %v1644 = vunpack.c.l.b16 %v438
    %v1645 = vunpack.c.h.b16 %v438
    %v1646 = vunpack.c.l.b16 %v439
    %v1647 = vunpack.c.h.b16 %v439
    %v1648 = vunpack.c.l.b16 %v440
    %v1649 = vunpack.c.h.b16 %v440
    %v1650 = vunpack.c.l.b16 %v441
    %v1651 = vunpack.c.h.b16 %v441
    %v1652 = vunpack.c.l.b16 %v442
    %v1653 = vunpack.c.h.b16 %v442
    %v1654 = vunpack.c.l.b16 %v443
    %v1655 = vunpack.c.h.b16 %v443
    %v1656 = vunpack.c.l.b16 %v444
    %v1657 = vunpack.c.h.b16 %v444
    %v1658 = vunpack.c.l.b16 %v445
    %v1659 = vunpack.c.h.b16 %v445
    %v1660 = vunpack.c.l.b16 %v446
    %v1661 = vunpack.c.h.b16 %v446
    %v1662 = vunpack.c.l.b16 %v447
    %v1663 = vunpack.c.h.b16 %v447
    %v1664 = vunpack.c.l.b16 %v448
    %v1665 = vunpack.c.h.b16 %v448
    %v1666 = vunpack.c.l.b16 %v449
    %v1667 = vunpack.c.h.b16 %v449
    %v1668 = vunpack.c.l.b16 %v450
    %v1669 = vunpack.c.h.b16 %v450
    %v1670 = vunpack.c.l.b16 %v451
    %v1671 = vunpack.c.h.b16 %v451
    %v1672 = vunpack.c.l.b16 %v452
    %v1673 = vunpack.c.h.b16 %v452
    %v1674 = vunpack.c.l.b16 %v453
    %v1675 = vunpack.c.h.b16 %v453
    %v1676 = vunpack.c.l.b16 %v454
    %v1677 = vunpack.c.h.b16 %v454
    %v1678 = vunpack.c.l.b16 %v455
    %v1679 = vunpack.c.h.b16 %v455
    %v1680 = vunpack.c.l.b16 %v456
    %v1681 = vunpack.c.h.b16 %v456
    %v1682 = vunpack.c.l.b16 %v457
    %v1683 = vunpack.c.h.b16 %v457
    %v1684 = vunpack.c.l.b16 %v458
    %v1685 = vunpack.c.h.b16 %v458
    %v1686 = vunpack.c.l.b16 %v459
    %v1687 = vunpack.c.h.b16 %v459
    %v1688 = vunpack.c.l.b16 %v460
    %v1689 = vunpack.c.h.b16 %v460
    %v1690 = vunpack.c.l.b16 %v461
    %v1691 = vunpack.c.h.b16 %v461
    %v1692 = vunpack.c.l.b16 %v462
    %v1693 = vunpack.c.h.b16 %v462
    %v1694 = vunpack.c.l.b16 %v463
    %v1695 = vunpack.c.h.b16 %v463
    %v1696 = vunpack.c.l.b16 %v464
    %v1697 = vunpack.c.h.b16 %v464
    %v1698 = vunpack.c.l.b16 %v465
    %v1699 = vunpack.c.h.b16 %v465
    %v1700 = vunpack.c.l.b16 %v466
    %v1701 = vunpack.c.h.b16 %v466
    %v1702 = vunpack.c.l.b16 %v467
    %v1703 = vunpack.c.h.b16 %v467
    %v1704 = vunpack.c.l.b16 %v468
    %v1705 = vunpack.c.h.b16 %v468
    %v1706 = vunpack.c.l.b16 %v469
    %v1707 = vunpack.c.h.b16 %v469
    %v1708 = vunpack.c.l.b16 %v470
    %v1709 = vunpack.c.h.b16 %v470
    %v1710 = vunpack.c.l.b16 %v471
    %v1711 = vunpack.c.h.b16 %v471
    %v1712 = vunpack.c.l.b16 %v472
    %v1713 = vunpack.c.h.b16 %v472
    %v1714 = vunpack.c.l.b16 %v473
    %v1715 = vunpack.c.h.b16 %v473
    %v1716 = vunpack.c.l.b16 %v474
    %v1717 = vunpack.c.h.b16 %v474
    %v1718 = vunpack.c.l.b16 %v475
    %v1719 = vunpack.c.h.b16 %v475
    %v1720 = vunpack.c.l.b16 %v476
    %v1721 = vunpack.c.h.b16 %v476
    %v1722 = vunpack.c.l.b16 %v477
    %v1723 = vunpack.c.h.b16 %v477
    %v1724 = vunpack.c.l.b16 %v478
    %v1725 = vunpack.c.h.b16 %v478
    %v1726 = vunpack.c.l.b16 %v479
    %v1727 = vunpack.c.h.b16 %v479
    %v1728 = vpack.c.b16 %v962, %v960
    %v1729 = vpack.c.b16 %v963, %v961
    %v1730 = vpack.c.b16 %v966, %v964
    %v1731 = vpack.c.b16 %v967, %v965
    %v1732 = vpack.c.b16 %v970, %v968
    %v1733 = vpack.c.b16 %v971, %v969
    %v1734 = vpack.c.b16 %v974, %v972
    %v1735 = vpack.c.b16 %v975, %v973
    %v1736 = vpack.c.b16 %v978, %v976
    %v1737 = vpack.c.b16 %v979, %v977
    %v1738 = vpack.c.b16 %v982, %v980
    %v1739 = vpack.c.b16 %v983, %v981
    %v1740 = vpack.c.b16 %v986, %v984
    %v1741 = vpack.c.b16 %v987, %v985
    %v1742 = vpack.c.b16 %v990, %v988
    %v1743 = vpack.c.b16 %v991, %v989
    %v1744 = vpack.c.b16 %v994, %v992
    %v1745 = vpack.c.b16 %v995, %v993
    %v1746 = vpack.c.b16 %v998, %v996
    %v1747 = vpack.c.b16 %v999, %v997
    %v1748 = vpack.c.b16 %v1002, %v1000
    %v1749 = vpack.c.b16 %v1003, %v1001
    %v1750 = vpack.c.b16 %v1006, %v1004
    %v1751 = vpack.c.b16 %v1007, %v1005
    %v1752 = vpack.c.b16 %v1010, %v1008
    %v1753 = vpack.c.b16 %v1011, %v1009
    %v1754 = vpack.c.b16 %v1014, %v1012
    %v1755 = vpack.c.b16 %v1015, %v1013
    %v1756 = vpack.c.b16 %v1018, %v1016
    %v1757 = vpack.c.b16 %v1019, %v1017
    %v1758 = vpack.c.b16 %v1022, %v1020
    %v1759 = vpack.c.b16 %v1023, %v1021
    %v1760 = vpack.c.b16 %v1026, %v1024
    %v1761 = vpack.c.b16 %v1027, %v1025
    %v1762 = vpack.c.b16 %v1030, %v1028
    %v1763 = vpack.c.b16 %v1031, %v1029
    %v1764 = vpack.c.b16 %v1034, %v1032
    %v1765 = vpack.c.b16 %v1035, %v1033
    %v1766 = vpack.c.b16 %v1038, %v1036
    %v1767 = vpack.c.b16 %v1039, %v1037
    %v1768 = vpack.c.b16 %v1042, %v1040
    %v1769 = vpack.c.b16 %v1043, %v1041
    %v1770 = vpack.c.b16 %v1046, %v1044
    %v1771 = vpack.c.b16 %v1047, %v1045
    %v1772 = vpack.c.b16 %v1050, %v1048
    %v1773 = vpack.c.b16 %v1051, %v1049
    %v1774 = vpack.c.b16 %v1054, %v1052
    %v1775 = vpack.c.b16 %v1055, %v1053
    %v1776 = vpack.c.b16 %v1058, %v1056
    %v1777 = vpack.c.b16 %v1059, %v1057
    %v1778 = vpack.c.b16 %v1062, %v1060
    %v1779 = vpack.c.b16 %v1063, %v1061
    %v1780 = vpack.c.b16 %v1066, %v1064
    %v1781 = vpack.c.b16 %v1067, %v1065
    %v1782 = vpack.c.b16 %v1070, %v1068
    %v1783 = vpack.c.b16 %v1071, %v1069
    %v1784 = vpack.c.b16 %v1074, %v1072
    %v1785 = vpack.c.b16 %v1075, %v1073
    %v1786 = vpack.c.b16 %v1078, %v1076
    %v1787 = vpack.c.b16 %v1079, %v1077
    %v1788 = vpack.c.b16 %v1082, %v1080
    %v1789 = vpack.c.b16 %v1083, %v1081
    %v1790 = vpack.c.b16 %v1086, %v1084
    %v1791 = vpack.c.b16 %v1087, %v1085
    %v1792 = vpack.c.b16 %v1090, %v1088
    %v1793 = vpack.c.b16 %v1091, %v1089
    %v1794 = vpack.c.b16 %v1094, %v1092
    %v1795 = vpack.c.b16 %v1095, %v1093
    %v1796 = vpack.c.b16 %v1098, %v1096
    %v1797 = vpack.c.b16 %v1099, %v1097
    %v1798 = vpack.c.b16 %v1102, %v1100
    %v1799 = vpack.c.b16 %v1103, %v1101
    %v1800 = vpack.c.b16 %v1106, %v1104
    %v1801 = vpack.c.b16 %v1107, %v1105
    %v1802 = vpack.c.b16 %v1110, %v1108
    %v1803 = vpack.c.b16 %v1111, %v1109
    %v1804 = vpack.c.b16 %v1114, %v1112
    %v1805 = vpack.c.b16 %v1115, %v1113
    %v1806 = vpack.c.b16 %v1118, %v1116
    %v1807 = vpack.c.b16 %v1119, %v1117
    %v1808 = vpack.c.b16 %v1122, %v1120
    %v1809 = vpack.c.b16 %v1123, %v1121
    %v1810 = vpack.c.b16 %v1126, %v1124
    %v1811 = vpack.c.b16 %v1127, %v1125
    %v1812 = vpack.c.b16 %v1130, %v1128
    %v1813 = vpack.c.b16 %v1131, %v1129
    %v1814 = vpack.c.b16 %v1134, %v1132
    %v1815 = vpack.c.b16 %v1135, %v1133
    %v1816 = vpack.c.b16 %v1138, %v1136
    %v1817 = vpack.c.b16 %v1139, %v1137
    %v1818 = vpack.c.b16 %v1142, %v1140
    %v1819 = vpack.c.b16 %v1143, %v1141
    %v1820 = vpack.c.b16 %v1146, %v1144
    %v1821 = vpack.c.b16 %v1147, %v1145
    %v1822 = vpack.c.b16 %v1150, %v1148
    %v1823 = vpack.c.b16 %v1151, %v1149
    %v1824 = vpack.c.b16 %v1154, %v1152
    %v1825 = vpack.c.b16 %v1155, %v1153
    %v1826 = vpack.c.b16 %v1158, %v1156
    %v1827 = vpack.c.b16 %v1159, %v1157
    %v1828 = vpack.c.b16 %v1162, %v1160
    %v1829 = vpack.c.b16 %v1163, %v1161
    %v1830 = vpack.c.b16 %v1166, %v1164
    %v1831 = vpack.c.b16 %v1167, %v1165
    %v1832 = vpack.c.b16 %v1170, %v1168
    %v1833 = vpack.c.b16 %v1171, %v1169
    %v1834 = vpack.c.b16 %v1174, %v1172
    %v1835 = vpack.c.b16 %v1175, %v1173
    %v1836 = vpack.c.b16 %v1178, %v1176
    %v1837 = vpack.c.b16 %v1179, %v1177
    %v1838 = vpack.c.b16 %v1182, %v1180
    %v1839 = vpack.c.b16 %v1183, %v1181
    %v1840 = vpack.c.b16 %v1186, %v1184
    %v1841 = vpack.c.b16 %v1187, %v1185
    %v1842 = vpack.c.b16 %v1190, %v1188
    %v1843 = vpack.c.b16 %v1191, %v1189
    %v1844 = vpack.c.b16 %v1194, %v1192
    %v1845 = vpack.c.b16 %v1195, %v1193
    %v1846 = vpack.c.b16 %v1198, %v1196
    %v1847 = vpack.c.b16 %v1199, %v1197
    %v1848 = vpack.c.b16 %v1202, %v1200
    %v1849 = vpack.c.b16 %v1203, %v1201
    %v1850 = vpack.c.b16 %v1206, %v1204
    %v1851 = vpack.c.b16 %v1207, %v1205
    %v1852 = vpack.c.b16 %v1210, %v1208
    %v1853 = vpack.c.b16 %v1211, %v1209
    %v1854 = vpack.c.b16 %v1214, %v1212
    %v1855 = vpack.c.b16 %v1215, %v1213
    %v1856 = vpack.c.b16 %v1218, %v1216
    %v1857 = vpack.c.b16 %v1219, %v1217
    %v1858 = vpack.c.b16 %v1222, %v1220
    %v1859 = vpack.c.b16 %v1223, %v1221
    %v1860 = vpack.c.b16 %v1226, %v1224
    %v1861 = vpack.c.b16 %v1227, %v1225
    %v1862 = vpack.c.b16 %v1230, %v1228
    %v1863 = vpack.c.b16 %v1231, %v1229
    %v1864 = vpack.c.b16 %v1234, %v1232
    %v1865 = vpack.c.b16 %v1235, %v1233
    %v1866 = vpack.c.b16 %v1238, %v1236
    %v1867 = vpack.c.b16 %v1239, %v1237
    %v1868 = vpack.c.b16 %v1242, %v1240
    %v1869 = vpack.c.b16 %v1243, %v1241
    %v1870 = vpack.c.b16 %v1246, %v1244
    %v1871 = vpack.c.b16 %v1247, %v1245
    %v1872 = vpack.c.b16 %v1250, %v1248
    %v1873 = vpack.c.b16 %v1251, %v1249
    %v1874 = vpack.c.b16 %v1254, %v1252
    %v1875 = vpack.c.b16 %v1255, %v1253
    %v1876 = vpack.c.b16 %v1258, %v1256
    %v1877 = vpack.c.b16 %v1259, %v1257
    %v1878 = vpack.c.b16 %v1262, %v1260
    %v1879 = vpack.c.b16 %v1263, %v1261
    %v1880 = vpack.c.b16 %v1266, %v1264
    %v1881 = vpack.c.b16 %v1267, %v1265
    %v1882 = vpack.c.b16 %v1270, %v1268
    %v1883 = vpack.c.b16 %v1271, %v1269
    %v1884 = vpack.c.b16 %v1274, %v1272
    %v1885 = vpack.c.b16 %v1275, %v1273
    %v1886 = vpack.c.b16 %v1278, %v1276
    %v1887 = vpack.c.b16 %v1279, %v1277
    %v1888 = vpack.c.b16 %v1282, %v1280
    %v1889 = vpack.c.b16 %v1283, %v1281
    %v1890 = vpack.c.b16 %v1286, %v1284
    %v1891 = vpack.c.b16 %v1287, %v1285
    %v1892 = vpack.c.b16 %v1290, %v1288
    %v1893 = vpack.c.b16 %v1291, %v1289
    %v1894 = vpack.c.b16 %v1294, %v1292
    %v1895 = vpack.c.b16 %v1295, %v1293
    %v1896 = vpack.c.b16 %v1298, %v1296
    %v1897 = vpack.c.b16 %v1299, %v1297
    %v1898 = vpack.c.b16 %v1302, %v1300
    %v1899 = vpack.c.b16 %v1303, %v1301
    %v1900 = vpack.c.b16 %v1306, %v1304
    %v1901 = vpack.c.b16 %v1307, %v1305
    %v1902 = vpack.c.b16 %v1310, %v1308
    %v1903 = vpack.c.b16 %v1311, %v1309
    %v1904 = vpack.c.b16 %v1314, %v1312
    %v1905 = vpack.c.b16 %v1315, %v1313
    %v1906 = vpack.c.b16 %v1318, %v1316
    %v1907 = vpack.c.b16 %v1319, %v1317
    %v1908 = vpack.c.b16 %v1322, %v1320
    %v1909 = vpack.c.b16 %v1323, %v1321
    %v1910 = vpack.c.b16 %v1326, %v1324
    %v1911 = vpack.c.b16 %v1327, %v1325
    %v1912 = vpack.c.b16 %v1330, %v1328
    %v1913 = vpack.c.b16 %v1331, %v1329
    %v1914 = vpack.c.b16 %v1334, %v1332
    %v1915 = vpack.c.b16 %v1335, %v1333
    %v1916 = vpack.c.b16 %v1338, %v1336
    %v1917 = vpack.c.b16 %v1339, %v1337
    %v1918 = vpack.c.b16 %v1342, %v1340
    %v1919 = vpack.c.b16 %v1343, %v1341
    %v1920 = vpack.c.b16 %v1346, %v1344
    %v1921 = vpack.c.b16 %v1347, %v1345
    %v1922 = vpack.c.b16 %v1350, %v1348
    %v1923 = vpack.c.b16 %v1351, %v1349
    %v1924 = vpack.c.b16 %v1354, %v1352
    %v1925 = vpack.c.b16 %v1355, %v1353
    %v1926 = vpack.c.b16 %v1358, %v1356
    %v1927 = vpack.c.b16 %v1359, %v1357
    %v1928 = vpack.c.b16 %v1362, %v1360
    %v1929 = vpack.c.b16 %v1363, %v1361
    %v1930 = vpack.c.b16 %v1366, %v1364
    %v1931 = vpack.c.b16 %v1367, %v1365
    %v1932 = vpack.c.b16 %v1370, %v1368
    %v1933 = vpack.c.b16 %v1371, %v1369
    %v1934 = vpack.c.b16 %v1374, %v1372
    %v1935 = vpack.c.b16 %v1375, %v1373
    %v1936 = vpack.c.b16 %v1378, %v1376
    %v1937 = vpack.c.b16 %v1379, %v1377
    %v1938 = vpack.c.b16 %v1382, %v1380
    %v1939 = vpack.c.b16 %v1383, %v1381
    %v1940 = vpack.c.b16 %v1386, %v1384
    %v1941 = vpack.c.b16 %v1387, %v1385
    %v1942 = vpack.c.b16 %v1390, %v1388
    %v1943 = vpack.c.b16 %v1391, %v1389
    %v1944 = vpack.c.b16 %v1394, %v1392
    %v1945 = vpack.c.b16 %v1395, %v1393
    %v1946 = vpack.c.b16 %v1398, %v1396
    %v1947 = vpack.c.b16 %v1399, %v1397
    %v1948 = vpack.c.b16 %v1402, %v1400
    %v1949 = vpack.c.b16 %v1403, %v1401
    %v1950 = vpack.c.b16 %v1406, %v1404
    %v1951 = vpack.c.b16 %v1407, %v1405
    %v1952 = vpack.c.b16 %v1410, %v1408
    %v1953 = vpack.c.b16 %v1411, %v1409
    %v1954 = vpack.c.b16 %v1414, %v1412
    %v1955 = vpack.c.b16 %v1415, %v1413
    %v1956 = vpack.c.b16 %v1418, %v1416
    %v1957 = vpack.c.b16 %v1419, %v1417
    %v1958 = vpack.c.b16 %v1422, %v1420
    %v1959 = vpack.c.b16 %v1423, %v1421
    %v1960 = vpack.c.b16 %v1426, %v1424
    %v1961 = vpack.c.b16 %v1427, %v1425
    %v1962 = vpack.c.b16 %v1430, %v1428
    %v1963 = vpack.c.b16 %v1431, %v1429
    %v1964 = vpack.c.b16 %v1434, %v1432
    %v1965 = vpack.c.b16 %v1435, %v1433
    %v1966 = vpack.c.b16 %v1438, %v1436
    %v1967 = vpack.c.b16 %v1439, %v1437
    %v1968 = vpack.c.b16 %v1442, %v1440
    %v1969 = vpack.c.b16 %v1443, %v1441
    %v1970 = vpack.c.b16 %v1446, %v1444
    %v1971 = vpack.c.b16 %v1447, %v1445
    %v1972 = vpack.c.b16 %v1450, %v1448
    %v1973 = vpack.c.b16 %v1451, %v1449
    %v1974 = vpack.c.b16 %v1454, %v1452
    %v1975 = vpack.c.b16 %v1455, %v1453
    %v1976 = vpack.c.b16 %v1458, %v1456
    %v1977 = vpack.c.b16 %v1459, %v1457
    %v1978 = vpack.c.b16 %v1462, %v1460
    %v1979 = vpack.c.b16 %v1463, %v1461
    %v1980 = vpack.c.b16 %v1466, %v1464
    %v1981 = vpack.c.b16 %v1467, %v1465
    %v1982 = vpack.c.b16 %v1470, %v1468
    %v1983 = vpack.c.b16 %v1471, %v1469
    %v1984 = vpack.c.b16 %v1474, %v1472
    %v1985 = vpack.c.b16 %v1475, %v1473
    %v1986 = vpack.c.b16 %v1478, %v1476
    %v1987 = vpack.c.b16 %v1479, %v1477
    %v1988 = vpack.c.b16 %v1482, %v1480
    %v1989 = vpack.c.b16 %v1483, %v1481
    %v1990 = vpack.c.b16 %v1486, %v1484
    %v1991 = vpack.c.b16 %v1487, %v1485
    %v1992 = vpack.c.b16 %v1490, %v1488
    %v1993 = vpack.c.b16 %v1491, %v1489
    %v1994 = vpack.c.b16 %v1494, %v1492
    %v1995 = vpack.c.b16 %v1495, %v1493
    %v1996 = vpack.c.b16 %v1498, %v1496
    %v1997 = vpack.c.b16 %v1499, %v1497
    %v1998 = vpack.c.b16 %v1502, %v1500
    %v1999 = vpack.c.b16 %v1503, %v1501
    %v2000 = vpack.c.b16 %v1506, %v1504
    %v2001 = vpack.c.b16 %v1507, %v1505
    %v2002 = vpack.c.b16 %v1510, %v1508
    %v2003 = vpack.c.b16 %v1511, %v1509
    %v2004 = vpack.c.b16 %v1514, %v1512
    %v2005 = vpack.c.b16 %v1515, %v1513
    %v2006 = vpack.c.b16 %v1518, %v1516
    %v2007 = vpack.c.b16 %v1519, %v1517
    %v2008 = vpack.c.b16 %v1522, %v1520
    %v2009 = vpack.c.b16 %v1523, %v1521
    %v2010 = vpack.c.b16 %v1526, %v1524
    %v2011 = vpack.c.b16 %v1527, %v1525
    %v2012 = vpack.c.b16 %v1530, %v1528
    %v2013 = vpack.c.b16 %v1531, %v1529
    %v2014 = vpack.c.b16 %v1534, %v1532
    %v2015 = vpack.c.b16 %v1535, %v1533
    %v2016 = vpack.c.b16 %v1538, %v1536
    %v2017 = vpack.c.b16 %v1539, %v1537
    %v2018 = vpack.c.b16 %v1542, %v1540
    %v2019 = vpack.c.b16 %v1543, %v1541
    %v2020 = vpack.c.b16 %v1546, %v1544
    %v2021 = vpack.c.b16 %v1547, %v1545
    %v2022 = vpack.c.b16 %v1550, %v1548
    %v2023 = vpack.c.b16 %v1551, %v1549
    %v2024 = vpack.c.b16 %v1554, %v1552
    %v2025 = vpack.c.b16 %v1555, %v1553
    %v2026 = vpack.c.b16 %v1558, %v1556
    %v2027 = vpack.c.b16 %v1559, %v1557
    %v2028 = vpack.c.b16 %v1562, %v1560
    %v2029 = vpack.c.b16 %v1563, %v1561
    %v2030 = vpack.c.b16 %v1566, %v1564
    %v2031 = vpack.c.b16 %v1567, %v1565
    %v2032 = vpack.c.b16 %v1570, %v1568
    %v2033 = vpack.c.b16 %v1571, %v1569
    %v2034 = vpack.c.b16 %v1574, %v1572
    %v2035 = vpack.c.b16 %v1575, %v1573
    %v2036 = vpack.c.b16 %v1578, %v1576
    %v2037 = vpack.c.b16 %v1579, %v1577
    %v2038 = vpack.c.b16 %v1582, %v1580
    %v2039 = vpack.c.b16 %v1583, %v1581
    %v2040 = vpack.c.b16 %v1586, %v1584
    %v2041 = vpack.c.b16 %v1587, %v1585
    %v2042 = vpack.c.b16 %v1590, %v1588
    %v2043 = vpack.c.b16 %v1591, %v1589
    %v2044 = vpack.c.b16 %v1594, %v1592
    %v2045 = vpack.c.b16 %v1595, %v1593
    %v2046 = vpack.c.b16 %v1598, %v1596
    %v2047 = vpack.c.b16 %v1599, %v1597
    %v2048 = vpack.c.b16 %v1602, %v1600
    %v2049 = vpack.c.b16 %v1603, %v1601
    %v2050 = vpack.c.b16 %v1606, %v1604
    %v2051 = vpack.c.b16 %v1607, %v1605
    %v2052 = vpack.c.b16 %v1610, %v1608
    %v2053 = vpack.c.b16 %v1611, %v1609
    %v2054 = vpack.c.b16 %v1614, %v1612
    %v2055 = vpack.c.b16 %v1615, %v1613
    %v2056 = vpack.c.b16 %v1618, %v1616
    %v2057 = vpack.c.b16 %v1619, %v1617
    %v2058 = vpack.c.b16 %v1622, %v1620
    %v2059 = vpack.c.b16 %v1623, %v1621
    %v2060 = vpack.c.b16 %v1626, %v1624
    %v2061 = vpack.c.b16 %v1627, %v1625
    %v2062 = vpack.c.b16 %v1630, %v1628
    %v2063 = vpack.c.b16 %v1631, %v1629
    %v2064 = vpack.c.b16 %v1634, %v1632
    %v2065 = vpack.c.b16 %v1635, %v1633
    %v2066 = vpack.c.b16 %v1638, %v1636
    %v2067 = vpack.c.b16 %v1639, %v1637
    %v2068 = vpack.c.b16 %v1642, %v1640
    %v2069 = vpack.c.b16 %v1643, %v1641
    %v2070 = vpack.c.b16 %v1646, %v1644
    %v2071 = vpack.c.b16 %v1647, %v1645
    %v2072 = vpack.c.b16 %v1650, %v1648
    %v2073 = vpack.c.b16 %v1651, %v1649
    %v2074 = vpack.c.b16 %v1654, %v1652
    %v2075 = vpack.c.b16 %v1655, %v1653
    %v2076 = vpack.c.b16 %v1658, %v1656
    %v2077 = vpack.c.b16 %v1659, %v1657
    %v2078 = vpack.c.b16 %v1662, %v1660
    %v2079 = vpack.c.b16 %v1663, %v1661
    %v2080 = vpack.c.b16 %v1666, %v1664
    %v2081 = vpack.c.b16 %v1667, %v1665
    %v2082 = vpack.c.b16 %v1670, %v1668
    %v2083 = vpack.c.b16 %v1671, %v1669
    %v2084 = vpack.c.b16 %v1674, %v1672
    %v2085 = vpack.c.b16 %v1675, %v1673
    %v2086 = vpack.c.b16 %v1678, %v1676
    %v2087 = vpack.c.b16 %v1679, %v1677
    %v2088 = vpack.c.b16 %v1682, %v1680
    %v2089 = vpack.c.b16 %v1683, %v1681
    %v2090 = vpack.c.b16 %v1686, %v1684
    %v2091 = vpack.c.b16 %v1687, %v1685
    %v2092 = vpack.c.b16 %v1690, %v1688
    %v2093 = vpack.c.b16 %v1691, %v1689
    %v2094 = vpack.c.b16 %v1694, %v1692
    %v2095 = vpack.c.b16 %v1695, %v1693
    %v2096 = vpack.c.b16 %v1698, %v1696
    %v2097 = vpack.c.b16 %v1699, %v1697
    %v2098 = vpack.c.b16 %v1702, %v1700
    %v2099 = vpack.c.b16 %v1703, %v1701
    %v2100 = vpack.c.b16 %v1706, %v1704
    %v2101 = vpack.c.b16 %v1707, %v1705
    %v2102 = vpack.c.b16 %v1710, %v1708
    %v2103 = vpack.c.b16 %v1711, %v1709
    %v2104 = vpack.c.b16 %v1714, %v1712
    %v2105 = vpack.c.b16 %v1715, %v1713
    %v2106 = vpack.c.b16 %v1718, %v1716
    %v2107 = vpack.c.b16 %v1719, %v1717
    %v2108 = vpack.c.b16 %v1722, %v1720
    %v2109 = vpack.c.b16 %v1723, %v1721
    %v2110 = vpack.c.b16 %v1726, %v1724
    %v2111 = vpack.c.b16 %v1727, %v1725
    %2496 = vmatprep.subr.bf16.mxu0 %v1729
    %2497 = vmatpush1.bf16.msra.mxu0 %v1728
    %2498 = vmatprep.subr.bf16.mxu0 %v1731
    %2499 = vmatpush1.bf16.msra.mxu0 %v1730
    %2500 = vmatprep.subr.bf16.mxu0 %v1733
    %2501 = vmatpush1.bf16.msra.mxu0 %v1732
    %2502 = vmatprep.subr.bf16.mxu0 %v1735
    %2503 = vmatpush1.bf16.msra.mxu0 %v1734
    %2504 = vmatprep.subr.bf16.mxu0 %v1737
    %2505 = vmatpush1.bf16.msra.mxu0 %v1736
    %2506 = vmatprep.subr.bf16.mxu0 %v1739
    %2507 = vmatpush1.bf16.msra.mxu0 %v1738
    %2508 = vmatprep.subr.bf16.mxu0 %v1741
    %2509 = vmatpush1.bf16.msra.mxu0 %v1740
    %2510 = vmatprep.subr.bf16.mxu0 %v1743
    %2511 = vmatpush1.bf16.msra.mxu0 %v1742
    %2512 = vmatprep.subr.bf16.mxu0 %v1745
    %2513 = vmatpush1.bf16.msra.mxu0 %v1744
    %2514 = vmatprep.subr.bf16.mxu0 %v1747
    %2515 = vmatpush1.bf16.msra.mxu0 %v1746
    %2516 = vmatprep.subr.bf16.mxu0 %v1749
    %2517 = vmatpush1.bf16.msra.mxu0 %v1748
    %2518 = vmatprep.subr.bf16.mxu0 %v1751
    %2519 = vmatpush1.bf16.msra.mxu0 %v1750
    %2520 = vmatprep.subr.bf16.mxu0 %v1753
    %2521 = vmatpush1.bf16.msra.mxu0 %v1752
    %2522 = vmatprep.subr.bf16.mxu0 %v1755
    %2523 = vmatpush1.bf16.msra.mxu0 %v1754
    %2524 = vmatprep.subr.bf16.mxu0 %v1757
    %2525 = vmatpush1.bf16.msra.mxu0 %v1756
    %2526 = vmatprep.subr.bf16.mxu0 %v1759
    %2527 = vmatpush1.bf16.msra.mxu0 %v1758
    %2528 = vmatprep.mubr.bf16.mxu0 %v529
    %2529 = vmatmul.mubr.bf16.gmra.mrb[0].mxu0 %v528
    %v2530 = vpop.f32.mrb[0].mxu0
    %v2531 = vadd.f32 %v485, %v2530
    %v2532 = vpop.f32.mrb[0].mxu0
    %v2533 = vadd.f32 %v489, %v2532
    %v2534 = vpop.f32.mrb[0].mxu0
    %v2535 = vpop.f32.mrb[0].mxu0
    %2536 = vdwg.mxu0
    %2537 = vmatprep.subr.bf16.mxu0 %v1761
    %2538 = vmatpush1.bf16.msra.mxu0 %v1760
    %2539 = vmatprep.subr.bf16.mxu0 %v1763
    %2540 = vmatpush1.bf16.msra.mxu0 %v1762
    %2541 = vmatprep.subr.bf16.mxu0 %v1765
    %2542 = vmatpush1.bf16.msra.mxu0 %v1764
    %2543 = vmatprep.subr.bf16.mxu0 %v1767
    %2544 = vmatpush1.bf16.msra.mxu0 %v1766
    %2545 = vmatprep.subr.bf16.mxu0 %v1769
    %2546 = vmatpush1.bf16.msra.mxu0 %v1768
    %2547 = vmatprep.subr.bf16.mxu0 %v1771
    %2548 = vmatpush1.bf16.msra.mxu0 %v1770
    %2549 = vmatprep.subr.bf16.mxu0 %v1773
    %2550 = vmatpush1.bf16.msra.mxu0 %v1772
    %2551 = vmatprep.subr.bf16.mxu0 %v1775
    %2552 = vmatpush1.bf16.msra.mxu0 %v1774
    %2553 = vmatprep.subr.bf16.mxu0 %v1777
    %2554 = vmatpush1.bf16.msra.mxu0 %v1776
    %2555 = vmatprep.subr.bf16.mxu0 %v1779
    %2556 = vmatpush1.bf16.msra.mxu0 %v1778
    %2557 = vmatprep.subr.bf16.mxu0 %v1781
    %2558 = vmatpush1.bf16.msra.mxu0 %v1780
    %2559 = vmatprep.subr.bf16.mxu0 %v1783
    %2560 = vmatpush1.bf16.msra.mxu0 %v1782
    %2561 = vmatprep.subr.bf16.mxu0 %v1785
    %2562 = vmatpush1.bf16.msra.mxu0 %v1784
    %2563 = vmatprep.subr.bf16.mxu0 %v1787
    %2564 = vmatpush1.bf16.msra.mxu0 %v1786
    %2565 = vmatprep.subr.bf16.mxu0 %v1789
    %2566 = vmatpush1.bf16.msra.mxu0 %v1788
    %2567 = vmatprep.subr.bf16.mxu0 %v1791
    %2568 = vmatpush1.bf16.msra.mxu0 %v1790
    %2569 = vmatprep.mubr.bf16.mxu0 %v531
    %2570 = vmatmul.mubr.bf16.gmra.mrb[0].mxu0 %v530
    %v2571 = vpop.f32.mrb[0].mxu0
    %v2572 = vadd.f32 %v2531, %v2571
    %v2573 = vpop.f32.mrb[0].mxu0
    %v2574 = vadd.f32 %v2533, %v2573
    %v2575 = vpop.f32.mrb[0].mxu0
    %v2576 = vpop.f32.mrb[0].mxu0
    %2577 = vdwg.mxu0
    %2578 = vmatprep.subr.bf16.mxu0 %v1793
    %2579 = vmatpush1.bf16.msra.mxu0 %v1792
    %2580 = vmatprep.subr.bf16.mxu0 %v1795
    %2581 = vmatpush1.bf16.msra.mxu0 %v1794
    %2582 = vmatprep.subr.bf16.mxu0 %v1797
    %2583 = vmatpush1.bf16.msra.mxu0 %v1796
    %2584 = vmatprep.subr.bf16.mxu0 %v1799
    %2585 = vmatpush1.bf16.msra.mxu0 %v1798
    %2586 = vmatprep.subr.bf16.mxu0 %v1801
    %2587 = vmatpush1.bf16.msra.mxu0 %v1800
    %2588 = vmatprep.subr.bf16.mxu0 %v1803
    %2589 = vmatpush1.bf16.msra.mxu0 %v1802
    %2590 = vmatprep.subr.bf16.mxu0 %v1805
    %2591 = vmatpush1.bf16.msra.mxu0 %v1804
    %2592 = vmatprep.subr.bf16.mxu0 %v1807
    %2593 = vmatpush1.bf16.msra.mxu0 %v1806
    %2594 = vmatprep.subr.bf16.mxu0 %v1809
    %2595 = vmatpush1.bf16.msra.mxu0 %v1808
    %2596 = vmatprep.subr.bf16.mxu0 %v1811
    %2597 = vmatpush1.bf16.msra.mxu0 %v1810
    %2598 = vmatprep.subr.bf16.mxu0 %v1813
    %2599 = vmatpush1.bf16.msra.mxu0 %v1812
    %2600 = vmatprep.subr.bf16.mxu0 %v1815
    %2601 = vmatpush1.bf16.msra.mxu0 %v1814
    %2602 = vmatprep.subr.bf16.mxu0 %v1817
    %2603 = vmatpush1.bf16.msra.mxu0 %v1816
    %2604 = vmatprep.subr.bf16.mxu0 %v1819
    %2605 = vmatpush1.bf16.msra.mxu0 %v1818
    %2606 = vmatprep.subr.bf16.mxu0 %v1821
    %2607 = vmatpush1.bf16.msra.mxu0 %v1820
    %2608 = vmatprep.subr.bf16.mxu0 %v1823
    %2609 = vmatpush1.bf16.msra.mxu0 %v1822
    %2610 = vmatprep.mubr.bf16.mxu0 %v533
    %2611 = vmatmul.mubr.bf16.gmra.mrb[0].mxu0 %v532
    %v2612 = vpop.f32.mrb[0].mxu0
    %v2613 = vadd.f32 %v2572, %v2612
    %v2614 = vpop.f32.mrb[0].mxu0
    %v2615 = vadd.f32 %v2574, %v2614
    %v2616 = vpop.f32.mrb[0].mxu0
    %v2617 = vpop.f32.mrb[0].mxu0
    %2618 = vdwg.mxu0
    %2619 = vmatprep.subr.bf16.mxu0 %v1825
    %2620 = vmatpush1.bf16.msra.mxu0 %v1824
    %2621 = vmatprep.subr.bf16.mxu0 %v1827
    %2622 = vmatpush1.bf16.msra.mxu0 %v1826
    %2623 = vmatprep.subr.bf16.mxu0 %v1829
    %2624 = vmatpush1.bf16.msra.mxu0 %v1828
    %2625 = vmatprep.subr.bf16.mxu0 %v1831
    %2626 = vmatpush1.bf16.msra.mxu0 %v1830
    %2627 = vmatprep.subr.bf16.mxu0 %v1833
    %2628 = vmatpush1.bf16.msra.mxu0 %v1832
    %2629 = vmatprep.subr.bf16.mxu0 %v1835
    %2630 = vmatpush1.bf16.msra.mxu0 %v1834
    %2631 = vmatprep.subr.bf16.mxu0 %v1837
    %2632 = vmatpush1.bf16.msra.mxu0 %v1836
    %2633 = vmatprep.subr.bf16.mxu0 %v1839
    %2634 = vmatpush1.bf16.msra.mxu0 %v1838
    %2635 = vmatprep.subr.bf16.mxu0 %v1841
    %2636 = vmatpush1.bf16.msra.mxu0 %v1840
    %2637 = vmatprep.subr.bf16.mxu0 %v1843
    %2638 = vmatpush1.bf16.msra.mxu0 %v1842
    %2639 = vmatprep.subr.bf16.mxu0 %v1845
    %2640 = vmatpush1.bf16.msra.mxu0 %v1844
    %2641 = vmatprep.subr.bf16.mxu0 %v1847
    %2642 = vmatpush1.bf16.msra.mxu0 %v1846
    %2643 = vmatprep.subr.bf16.mxu0 %v1849
    %2644 = vmatpush1.bf16.msra.mxu0 %v1848
    %2645 = vmatprep.subr.bf16.mxu0 %v1851
    %2646 = vmatpush1.bf16.msra.mxu0 %v1850
    %2647 = vmatprep.subr.bf16.mxu0 %v1853
    %2648 = vmatpush1.bf16.msra.mxu0 %v1852
    %2649 = vmatprep.subr.bf16.mxu0 %v1855
    %2650 = vmatpush1.bf16.msra.mxu0 %v1854
    %2651 = vmatprep.mubr.bf16.mxu0 %v535
    %2652 = vmatmul.mubr.bf16.gmra.mrb[0].mxu0 %v534
    %v2653 = vpop.f32.mrb[0].mxu0
    %v2654 = vadd.f32 %v2613, %v2653
    %v2655 = vpop.f32.mrb[0].mxu0
    %v2656 = vadd.f32 %v2615, %v2655
    %v2657 = vpop.f32.mrb[0].mxu0
    %v2658 = vpop.f32.mrb[0].mxu0
    %2659 = vdwg.mxu0
    %2660 = vmatprep.subr.bf16.mxu0 %v1857
    %2661 = vmatpush1.bf16.msra.mxu0 %v1856
    %2662 = vmatprep.subr.bf16.mxu0 %v1859
    %2663 = vmatpush1.bf16.msra.mxu0 %v1858
    %2664 = vmatprep.subr.bf16.mxu0 %v1861
    %2665 = vmatpush1.bf16.msra.mxu0 %v1860
    %2666 = vmatprep.subr.bf16.mxu0 %v1863
    %2667 = vmatpush1.bf16.msra.mxu0 %v1862
    %2668 = vmatprep.subr.bf16.mxu0 %v1865
    %2669 = vmatpush1.bf16.msra.mxu0 %v1864
    %2670 = vmatprep.subr.bf16.mxu0 %v1867
    %2671 = vmatpush1.bf16.msra.mxu0 %v1866
    %2672 = vmatprep.subr.bf16.mxu0 %v1869
    %2673 = vmatpush1.bf16.msra.mxu0 %v1868
    %2674 = vmatprep.subr.bf16.mxu0 %v1871
    %2675 = vmatpush1.bf16.msra.mxu0 %v1870
    %2676 = vmatprep.subr.bf16.mxu0 %v1873
    %2677 = vmatpush1.bf16.msra.mxu0 %v1872
    %2678 = vmatprep.subr.bf16.mxu0 %v1875
    %2679 = vmatpush1.bf16.msra.mxu0 %v1874
    %2680 = vmatprep.subr.bf16.mxu0 %v1877
    %2681 = vmatpush1.bf16.msra.mxu0 %v1876
    %2682 = vmatprep.subr.bf16.mxu0 %v1879
    %2683 = vmatpush1.bf16.msra.mxu0 %v1878
    %2684 = vmatprep.subr.bf16.mxu0 %v1881
    %2685 = vmatpush1.bf16.msra.mxu0 %v1880
    %2686 = vmatprep.subr.bf16.mxu0 %v1883
    %2687 = vmatpush1.bf16.msra.mxu0 %v1882
    %2688 = vmatprep.subr.bf16.mxu0 %v1885
    %2689 = vmatpush1.bf16.msra.mxu0 %v1884
    %2690 = vmatprep.subr.bf16.mxu0 %v1887
    %2691 = vmatpush1.bf16.msra.mxu0 %v1886
    %2692 = vmatprep.mubr.bf16.mxu0 %v537
    %2693 = vmatmul.mubr.bf16.gmra.mrb[0].mxu0 %v536
    %v2694 = vpop.f32.mrb[0].mxu0
    %v2695 = vadd.f32 %v2654, %v2694
    %v2696 = vpop.f32.mrb[0].mxu0
    %v2697 = vadd.f32 %v2656, %v2696
    %v2698 = vpop.f32.mrb[0].mxu0
    %v2699 = vpop.f32.mrb[0].mxu0
    %2700 = vdwg.mxu0
    %2701 = vmatprep.subr.bf16.mxu0 %v1889
    %2702 = vmatpush1.bf16.msra.mxu0 %v1888
    %2703 = vmatprep.subr.bf16.mxu0 %v1891
    %2704 = vmatpush1.bf16.msra.mxu0 %v1890
    %2705 = vmatprep.subr.bf16.mxu0 %v1893
    %2706 = vmatpush1.bf16.msra.mxu0 %v1892
    %2707 = vmatprep.subr.bf16.mxu0 %v1895
    %2708 = vmatpush1.bf16.msra.mxu0 %v1894
    %2709 = vmatprep.subr.bf16.mxu0 %v1897
    %2710 = vmatpush1.bf16.msra.mxu0 %v1896
    %2711 = vmatprep.subr.bf16.mxu0 %v1899
    %2712 = vmatpush1.bf16.msra.mxu0 %v1898
    %2713 = vmatprep.subr.bf16.mxu0 %v1901
    %2714 = vmatpush1.bf16.msra.mxu0 %v1900
    %2715 = vmatprep.subr.bf16.mxu0 %v1903
    %2716 = vmatpush1.bf16.msra.mxu0 %v1902
    %2717 = vmatprep.subr.bf16.mxu0 %v1905
    %2718 = vmatpush1.bf16.msra.mxu0 %v1904
    %2719 = vmatprep.subr.bf16.mxu0 %v1907
    %2720 = vmatpush1.bf16.msra.mxu0 %v1906
    %2721 = vmatprep.subr.bf16.mxu0 %v1909
    %2722 = vmatpush1.bf16.msra.mxu0 %v1908
    %2723 = vmatprep.subr.bf16.mxu0 %v1911
    %2724 = vmatpush1.bf16.msra.mxu0 %v1910
    %2725 = vmatprep.subr.bf16.mxu0 %v1913
    %2726 = vmatpush1.bf16.msra.mxu0 %v1912
    %2727 = vmatprep.subr.bf16.mxu0 %v1915
    %2728 = vmatpush1.bf16.msra.mxu0 %v1914
    %2729 = vmatprep.subr.bf16.mxu0 %v1917
    %2730 = vmatpush1.bf16.msra.mxu0 %v1916
    %2731 = vmatprep.subr.bf16.mxu0 %v1919
    %2732 = vmatpush1.bf16.msra.mxu0 %v1918
    %2733 = vmatprep.mubr.bf16.mxu0 %v539
    %2734 = vmatmul.mubr.bf16.gmra.mrb[0].mxu0 %v538
    %v2735 = vpop.f32.mrb[0].mxu0
    %v2736 = vadd.f32 %v2695, %v2735
    %v2737 = vpop.f32.mrb[0].mxu0
    %v2738 = vadd.f32 %v2697, %v2737
    %v2739 = vpop.f32.mrb[0].mxu0
    %v2740 = vpop.f32.mrb[0].mxu0
    %2741 = vdwg.mxu0
    %2742 = vmatprep.subr.bf16.mxu0 %v1921
    %2743 = vmatpush1.bf16.msra.mxu0 %v1920
    %2744 = vmatprep.subr.bf16.mxu0 %v1923
    %2745 = vmatpush1.bf16.msra.mxu0 %v1922
    %2746 = vmatprep.subr.bf16.mxu0 %v1925
    %2747 = vmatpush1.bf16.msra.mxu0 %v1924
    %2748 = vmatprep.subr.bf16.mxu0 %v1927
    %2749 = vmatpush1.bf16.msra.mxu0 %v1926
    %2750 = vmatprep.subr.bf16.mxu0 %v1929
    %2751 = vmatpush1.bf16.msra.mxu0 %v1928
    %2752 = vmatprep.subr.bf16.mxu0 %v1931
    %2753 = vmatpush1.bf16.msra.mxu0 %v1930
    %2754 = vmatprep.subr.bf16.mxu0 %v1933
    %2755 = vmatpush1.bf16.msra.mxu0 %v1932
    %2756 = vmatprep.subr.bf16.mxu0 %v1935
    %2757 = vmatpush1.bf16.msra.mxu0 %v1934
    %2758 = vmatprep.subr.bf16.mxu0 %v1937
    %2759 = vmatpush1.bf16.msra.mxu0 %v1936
    %2760 = vmatprep.subr.bf16.mxu0 %v1939
    %2761 = vmatpush1.bf16.msra.mxu0 %v1938
    %2762 = vmatprep.subr.bf16.mxu0 %v1941
    %2763 = vmatpush1.bf16.msra.mxu0 %v1940
    %2764 = vmatprep.subr.bf16.mxu0 %v1943
    %2765 = vmatpush1.bf16.msra.mxu0 %v1942
    %2766 = vmatprep.subr.bf16.mxu0 %v1945
    %2767 = vmatpush1.bf16.msra.mxu0 %v1944
    %2768 = vmatprep.subr.bf16.mxu0 %v1947
    %2769 = vmatpush1.bf16.msra.mxu0 %v1946
    %2770 = vmatprep.subr.bf16.mxu0 %v1949
    %2771 = vmatpush1.bf16.msra.mxu0 %v1948
    %2772 = vmatprep.subr.bf16.mxu0 %v1951
    %2773 = vmatpush1.bf16.msra.mxu0 %v1950
    %2774 = vmatprep.mubr.bf16.mxu0 %v541
    %2775 = vmatmul.mubr.bf16.gmra.mrb[0].mxu0 %v540
    %v2776 = vpop.f32.mrb[0].mxu0
    %v2777 = vadd.f32 %v2736, %v2776
    %v2778 = vpop.f32.mrb[0].mxu0
    %v2779 = vadd.f32 %v2738, %v2778
    %v2780 = vpop.f32.mrb[0].mxu0
    %v2781 = vpop.f32.mrb[0].mxu0
    %2782 = vdwg.mxu0
    %2783 = vmatprep.subr.bf16.mxu0 %v1953
    %2784 = vmatpush1.bf16.msra.mxu0 %v1952
    %2785 = vmatprep.subr.bf16.mxu0 %v1955
    %2786 = vmatpush1.bf16.msra.mxu0 %v1954
    %2787 = vmatprep.subr.bf16.mxu0 %v1957
    %2788 = vmatpush1.bf16.msra.mxu0 %v1956
    %2789 = vmatprep.subr.bf16.mxu0 %v1959
    %2790 = vmatpush1.bf16.msra.mxu0 %v1958
    %2791 = vmatprep.subr.bf16.mxu0 %v1961
    %2792 = vmatpush1.bf16.msra.mxu0 %v1960
    %2793 = vmatprep.subr.bf16.mxu0 %v1963
    %2794 = vmatpush1.bf16.msra.mxu0 %v1962
    %2795 = vmatprep.subr.bf16.mxu0 %v1965
    %2796 = vmatpush1.bf16.msra.mxu0 %v1964
    %2797 = vmatprep.subr.bf16.mxu0 %v1967
    %2798 = vmatpush1.bf16.msra.mxu0 %v1966
    %2799 = vmatprep.subr.bf16.mxu0 %v1969
    %2800 = vmatpush1.bf16.msra.mxu0 %v1968
    %2801 = vmatprep.subr.bf16.mxu0 %v1971
    %2802 = vmatpush1.bf16.msra.mxu0 %v1970
    %2803 = vmatprep.subr.bf16.mxu0 %v1973
    %2804 = vmatpush1.bf16.msra.mxu0 %v1972
    %2805 = vmatprep.subr.bf16.mxu0 %v1975
    %2806 = vmatpush1.bf16.msra.mxu0 %v1974
    %2807 = vmatprep.subr.bf16.mxu0 %v1977
    %2808 = vmatpush1.bf16.msra.mxu0 %v1976
    %2809 = vmatprep.subr.bf16.mxu0 %v1979
    %2810 = vmatpush1.bf16.msra.mxu0 %v1978
    %2811 = vmatprep.subr.bf16.mxu0 %v1981
    %2812 = vmatpush1.bf16.msra.mxu0 %v1980
    %2813 = vmatprep.subr.bf16.mxu0 %v1983
    %2814 = vmatpush1.bf16.msra.mxu0 %v1982
    %2815 = vmatprep.mubr.bf16.mxu0 %v543
    %2816 = vmatmul.mubr.bf16.gmra.mrb[0].mxu0 %v542
    %v2817 = vpop.f32.mrb[0].mxu0
    %v2818 = vadd.f32 %v2777, %v2817
    %v2819 = vpop.f32.mrb[0].mxu0
    %v2820 = vadd.f32 %v2779, %v2819
    %v2821 = vpop.f32.mrb[0].mxu0
    %v2822 = vpop.f32.mrb[0].mxu0
    %2823 = vdwg.mxu0
    %2824 = vmatprep.subr.bf16.mxu0 %v1985
    %2825 = vmatpush1.bf16.msra.mxu0 %v1984
    %2826 = vmatprep.subr.bf16.mxu0 %v1987
    %2827 = vmatpush1.bf16.msra.mxu0 %v1986
    %2828 = vmatprep.subr.bf16.mxu0 %v1989
    %2829 = vmatpush1.bf16.msra.mxu0 %v1988
    %2830 = vmatprep.subr.bf16.mxu0 %v1991
    %2831 = vmatpush1.bf16.msra.mxu0 %v1990
    %2832 = vmatprep.subr.bf16.mxu0 %v1993
    %2833 = vmatpush1.bf16.msra.mxu0 %v1992
    %2834 = vmatprep.subr.bf16.mxu0 %v1995
    %2835 = vmatpush1.bf16.msra.mxu0 %v1994
    %2836 = vmatprep.subr.bf16.mxu0 %v1997
    %2837 = vmatpush1.bf16.msra.mxu0 %v1996
    %2838 = vmatprep.subr.bf16.mxu0 %v1999
    %2839 = vmatpush1.bf16.msra.mxu0 %v1998
    %2840 = vmatprep.subr.bf16.mxu0 %v2001
    %2841 = vmatpush1.bf16.msra.mxu0 %v2000
    %2842 = vmatprep.subr.bf16.mxu0 %v2003
    %2843 = vmatpush1.bf16.msra.mxu0 %v2002
    %2844 = vmatprep.subr.bf16.mxu0 %v2005
    %2845 = vmatpush1.bf16.msra.mxu0 %v2004
    %2846 = vmatprep.subr.bf16.mxu0 %v2007
    %2847 = vmatpush1.bf16.msra.mxu0 %v2006
    %2848 = vmatprep.subr.bf16.mxu0 %v2009
    %2849 = vmatpush1.bf16.msra.mxu0 %v2008
    %2850 = vmatprep.subr.bf16.mxu0 %v2011
    %2851 = vmatpush1.bf16.msra.mxu0 %v2010
    %2852 = vmatprep.subr.bf16.mxu0 %v2013
    %2853 = vmatpush1.bf16.msra.mxu0 %v2012
    %2854 = vmatprep.subr.bf16.mxu0 %v2015
    %2855 = vmatpush1.bf16.msra.mxu0 %v2014
    %2856 = vmatprep.mubr.bf16.mxu0 %v545
    %2857 = vmatmul.mubr.bf16.gmra.mrb[0].mxu0 %v544
    %v2858 = vpop.f32.mrb[0].mxu0
    %v2859 = vadd.f32 %v2818, %v2858
    %v2860 = vpop.f32.mrb[0].mxu0
    %v2861 = vadd.f32 %v2820, %v2860
    %v2862 = vpop.f32.mrb[0].mxu0
    %v2863 = vpop.f32.mrb[0].mxu0
    %2864 = vdwg.mxu0
    %2865 = vmatprep.subr.bf16.mxu0 %v2017
    %2866 = vmatpush1.bf16.msra.mxu0 %v2016
    %2867 = vmatprep.subr.bf16.mxu0 %v2019
    %2868 = vmatpush1.bf16.msra.mxu0 %v2018
    %2869 = vmatprep.subr.bf16.mxu0 %v2021
    %2870 = vmatpush1.bf16.msra.mxu0 %v2020
    %2871 = vmatprep.subr.bf16.mxu0 %v2023
    %2872 = vmatpush1.bf16.msra.mxu0 %v2022
    %2873 = vmatprep.subr.bf16.mxu0 %v2025
    %2874 = vmatpush1.bf16.msra.mxu0 %v2024
    %2875 = vmatprep.subr.bf16.mxu0 %v2027
    %2876 = vmatpush1.bf16.msra.mxu0 %v2026
    %2877 = vmatprep.subr.bf16.mxu0 %v2029
    %2878 = vmatpush1.bf16.msra.mxu0 %v2028
    %2879 = vmatprep.subr.bf16.mxu0 %v2031
    %2880 = vmatpush1.bf16.msra.mxu0 %v2030
    %2881 = vmatprep.subr.bf16.mxu0 %v2033
    %2882 = vmatpush1.bf16.msra.mxu0 %v2032
    %2883 = vmatprep.subr.bf16.mxu0 %v2035
    %2884 = vmatpush1.bf16.msra.mxu0 %v2034
    %2885 = vmatprep.subr.bf16.mxu0 %v2037
    %2886 = vmatpush1.bf16.msra.mxu0 %v2036
    %2887 = vmatprep.subr.bf16.mxu0 %v2039
    %2888 = vmatpush1.bf16.msra.mxu0 %v2038
    %2889 = vmatprep.subr.bf16.mxu0 %v2041
    %2890 = vmatpush1.bf16.msra.mxu0 %v2040
    %2891 = vmatprep.subr.bf16.mxu0 %v2043
    %2892 = vmatpush1.bf16.msra.mxu0 %v2042
    %2893 = vmatprep.subr.bf16.mxu0 %v2045
    %2894 = vmatpush1.bf16.msra.mxu0 %v2044
    %2895 = vmatprep.subr.bf16.mxu0 %v2047
    %2896 = vmatpush1.bf16.msra.mxu0 %v2046
    %2897 = vmatprep.mubr.bf16.mxu0 %v547
    %2898 = vmatmul.mubr.bf16.gmra.mrb[0].mxu0 %v546
    %v2899 = vpop.f32.mrb[0].mxu0
    %v2900 = vadd.f32 %v2859, %v2899
    %v2901 = vpop.f32.mrb[0].mxu0
    %v2902 = vadd.f32 %v2861, %v2901
    %v2903 = vpop.f32.mrb[0].mxu0
    %v2904 = vpop.f32.mrb[0].mxu0
    %2905 = vdwg.mxu0
    %2906 = vmatprep.subr.bf16.mxu0 %v2049
    %2907 = vmatpush1.bf16.msra.mxu0 %v2048
    %2908 = vmatprep.subr.bf16.mxu0 %v2051
    %2909 = vmatpush1.bf16.msra.mxu0 %v2050
    %2910 = vmatprep.subr.bf16.mxu0 %v2053
    %2911 = vmatpush1.bf16.msra.mxu0 %v2052
    %2912 = vmatprep.subr.bf16.mxu0 %v2055
    %2913 = vmatpush1.bf16.msra.mxu0 %v2054
    %2914 = vmatprep.subr.bf16.mxu0 %v2057
    %2915 = vmatpush1.bf16.msra.mxu0 %v2056
    %2916 = vmatprep.subr.bf16.mxu0 %v2059
    %2917 = vmatpush1.bf16.msra.mxu0 %v2058
    %2918 = vmatprep.subr.bf16.mxu0 %v2061
    %2919 = vmatpush1.bf16.msra.mxu0 %v2060
    %2920 = vmatprep.subr.bf16.mxu0 %v2063
    %2921 = vmatpush1.bf16.msra.mxu0 %v2062
    %2922 = vmatprep.subr.bf16.mxu0 %v2065
    %2923 = vmatpush1.bf16.msra.mxu0 %v2064
    %2924 = vmatprep.subr.bf16.mxu0 %v2067
    %2925 = vmatpush1.bf16.msra.mxu0 %v2066
    %2926 = vmatprep.subr.bf16.mxu0 %v2069
    %2927 = vmatpush1.bf16.msra.mxu0 %v2068
    %2928 = vmatprep.subr.bf16.mxu0 %v2071
    %2929 = vmatpush1.bf16.msra.mxu0 %v2070
    %2930 = vmatprep.subr.bf16.mxu0 %v2073
    %2931 = vmatpush1.bf16.msra.mxu0 %v2072
    %2932 = vmatprep.subr.bf16.mxu0 %v2075
    %2933 = vmatpush1.bf16.msra.mxu0 %v2074
    %2934 = vmatprep.subr.bf16.mxu0 %v2077
    %2935 = vmatpush1.bf16.msra.mxu0 %v2076
    %2936 = vmatprep.subr.bf16.mxu0 %v2079
    %2937 = vmatpush1.bf16.msra.mxu0 %v2078
    %2938 = vmatprep.mubr.bf16.mxu0 %v549
    %2939 = vmatmul.mubr.bf16.gmra.mrb[0].mxu0 %v548
    %v2940 = vpop.f32.mrb[0].mxu0
    %v2941 = vadd.f32 %v2900, %v2940
    %v2942 = vpop.f32.mrb[0].mxu0
    %v2943 = vadd.f32 %v2902, %v2942
    %v2944 = vpop.f32.mrb[0].mxu0
    %v2945 = vpop.f32.mrb[0].mxu0
    %2946 = vdwg.mxu0
    %2947 = vmatprep.subr.bf16.mxu0 %v2081
    %2948 = vmatpush1.bf16.msra.mxu0 %v2080
    %2949 = vmatprep.subr.bf16.mxu0 %v2083
    %2950 = vmatpush1.bf16.msra.mxu0 %v2082
    %2951 = vmatprep.subr.bf16.mxu0 %v2085
    %2952 = vmatpush1.bf16.msra.mxu0 %v2084
    %2953 = vmatprep.subr.bf16.mxu0 %v2087
    %2954 = vmatpush1.bf16.msra.mxu0 %v2086
    %2955 = vmatprep.subr.bf16.mxu0 %v2089
    %2956 = vmatpush1.bf16.msra.mxu0 %v2088
    %2957 = vmatprep.subr.bf16.mxu0 %v2091
    %2958 = vmatpush1.bf16.msra.mxu0 %v2090
    %2959 = vmatprep.subr.bf16.mxu0 %v2093
    %2960 = vmatpush1.bf16.msra.mxu0 %v2092
    %2961 = vmatprep.subr.bf16.mxu0 %v2095
    %2962 = vmatpush1.bf16.msra.mxu0 %v2094
    %2963 = vmatprep.subr.bf16.mxu0 %v2097
    %2964 = vmatpush1.bf16.msra.mxu0 %v2096
    %2965 = vmatprep.subr.bf16.mxu0 %v2099
    %2966 = vmatpush1.bf16.msra.mxu0 %v2098
    %2967 = vmatprep.subr.bf16.mxu0 %v2101
    %2968 = vmatpush1.bf16.msra.mxu0 %v2100
    %2969 = vmatprep.subr.bf16.mxu0 %v2103
    %2970 = vmatpush1.bf16.msra.mxu0 %v2102
    %2971 = vmatprep.subr.bf16.mxu0 %v2105
    %2972 = vmatpush1.bf16.msra.mxu0 %v2104
    %2973 = vmatprep.subr.bf16.mxu0 %v2107
    %2974 = vmatpush1.bf16.msra.mxu0 %v2106
    %2975 = vmatprep.subr.bf16.mxu0 %v2109
    %2976 = vmatpush1.bf16.msra.mxu0 %v2108
    %2977 = vmatprep.subr.bf16.mxu0 %v2111
    %2978 = vmatpush1.bf16.msra.mxu0 %v2110
    %2979 = vmatprep.mubr.bf16.mxu0 %v551
    %2980 = vmatmul.mubr.bf16.gmra.mrb[0].mxu0 %v550
    %v2981 = vpop.f32.mrb[0].mxu0
    %v2982 = vadd.f32 %v2941, %v2981
    %v2983 = vpop.f32.mrb[0].mxu0
    %v2984 = vadd.f32 %v2943, %v2983
    %v2985 = vpop.f32.mrb[0].mxu0
    %v2986 = vpop.f32.mrb[0].mxu0
    %2987 = vdwg.mxu0
    %v2988 = vmax.f32 %v2982, 0.0
    %v2989 = vmax.f32 %v2984, 0.0
    %v2990 = vpack.c.bf16 %v2988, %v2988
    %v2991 = vpack.c.bf16 %v2989, %v2989
    %v2992 = vld [vmem:[#allocation8] sm:$0xf]
    %v2993 = vld [vmem:[#allocation8 + $0x4] sm:$0xf]
    %v2994 = vld [vmem:[#allocation8 + $0x8] sm:$0xf]
    %v2995 = vld [vmem:[#allocation8 + $0xc] sm:$0xf]
    %v2996 = vld [vmem:[#allocation8 + $0x10] sm:$0xf]
    %v2997 = vld [vmem:[#allocation8 + $0x14] sm:$0xf]
    %v2998 = vld [vmem:[#allocation8 + $0x18] sm:$0xf]
    %v2999 = vld [vmem:[#allocation8 + $0x1c] sm:$0xf]
    %v3000 = vld [vmem:[#allocation8 + $0x20] sm:$0xf]
    %v3001 = vld [vmem:[#allocation8 + $0x24] sm:$0xf]
    %v3002 = vld [vmem:[#allocation8 + $0x28] sm:$0xf]
    %v3003 = vld [vmem:[#allocation8 + $0x2c] sm:$0xf]
    %v3004 = vld [vmem:[#allocation8 + $0x30] sm:$0xf]
    %v3005 = vld [vmem:[#allocation8 + $0x34] sm:$0xf]
    %v3006 = vld [vmem:[#allocation8 + $0x38] sm:$0xf]
    %v3007 = vld [vmem:[#allocation8 + $0x3c] sm:$0xf]
    %v3008 = vld [vmem:[#allocation8 + $0x40] sm:$0xf]
    %v3009 = vld [vmem:[#allocation8 + $0x44] sm:$0xf]
    %v3010 = vld [vmem:[#allocation8 + $0x48] sm:$0xf]
    %v3011 = vld [vmem:[#allocation8 + $0x4c] sm:$0xf]
    %v3012 = vld [vmem:[#allocation8 + $0x50] sm:$0xf]
    %v3013 = vld [vmem:[#allocation8 + $0x54] sm:$0xf]
    %v3014 = vld [vmem:[#allocation8 + $0x58] sm:$0xf]
    %v3015 = vld [vmem:[#allocation8 + $0x5c] sm:$0xf]
    %v3016 = vld [vmem:[#allocation8 + $0x60] sm:$0xf]
    %v3017 = vld [vmem:[#allocation8 + $0x64] sm:$0xf]
    %v3018 = vld [vmem:[#allocation8 + $0x68] sm:$0xf]
    %v3019 = vld [vmem:[#allocation8 + $0x6c] sm:$0xf]
    %v3020 = vld [vmem:[#allocation8 + $0x70] sm:$0xf]
    %v3021 = vld [vmem:[#allocation8 + $0x74] sm:$0xf]
    %v3022 = vld [vmem:[#allocation8 + $0x78] sm:$0xf]
    %v3023 = vld [vmem:[#allocation8 + $0x7c] sm:$0xf]
    %v3024 = vld [vmem:[#allocation10] sm:$0x1]
    %v3026 = vlaneseq
    %v3027 = vshrl.u32 %v3026, 7
    %v3028 = vsub.s32 0, %v3027
    %v3029 = vrot.slane %v3024, %v3028
    %v3063 = vunpack.c.l.b16 %v2992
    %v3064 = vunpack.c.l.b16 %v2993
    %v3065 = vunpack.c.l.b16 %v2994
    %v3066 = vunpack.c.l.b16 %v2995
    %v3067 = vunpack.c.l.b16 %v2996
    %v3068 = vunpack.c.l.b16 %v2997
    %v3069 = vunpack.c.l.b16 %v2998
    %v3070 = vunpack.c.l.b16 %v2999
    %v3071 = vunpack.c.l.b16 %v3000
    %v3072 = vunpack.c.l.b16 %v3001
    %v3073 = vunpack.c.l.b16 %v3002
    %v3074 = vunpack.c.l.b16 %v3003
    %v3075 = vunpack.c.l.b16 %v3004
    %v3076 = vunpack.c.l.b16 %v3005
    %v3077 = vunpack.c.l.b16 %v3006
    %v3078 = vunpack.c.l.b16 %v3007
    %v3079 = vunpack.c.l.b16 %v3008
    %v3080 = vunpack.c.l.b16 %v3009
    %v3081 = vunpack.c.l.b16 %v3010
    %v3082 = vunpack.c.l.b16 %v3011
    %v3083 = vunpack.c.l.b16 %v3012
    %v3084 = vunpack.c.l.b16 %v3013
    %v3085 = vunpack.c.l.b16 %v3014
    %v3086 = vunpack.c.l.b16 %v3015
    %v3087 = vunpack.c.l.b16 %v3016
    %v3088 = vunpack.c.l.b16 %v3017
    %v3089 = vunpack.c.l.b16 %v3018
    %v3090 = vunpack.c.l.b16 %v3019
    %v3091 = vunpack.c.l.b16 %v3020
    %v3092 = vunpack.c.l.b16 %v3021
    %v3093 = vunpack.c.l.b16 %v3022
    %v3094 = vunpack.c.l.b16 %v3023
    %v3095 = vpack.c.b16 %v3064, %v3063
    %v3096 = vpack.c.b16 %v3066, %v3065
    %v3097 = vpack.c.b16 %v3068, %v3067
    %v3098 = vpack.c.b16 %v3070, %v3069
    %v3099 = vpack.c.b16 %v3072, %v3071
    %v3100 = vpack.c.b16 %v3074, %v3073
    %v3101 = vpack.c.b16 %v3076, %v3075
    %v3102 = vpack.c.b16 %v3078, %v3077
    %v3103 = vpack.c.b16 %v3080, %v3079
    %v3104 = vpack.c.b16 %v3082, %v3081
    %v3105 = vpack.c.b16 %v3084, %v3083
    %v3106 = vpack.c.b16 %v3086, %v3085
    %v3107 = vpack.c.b16 %v3088, %v3087
    %v3108 = vpack.c.b16 %v3090, %v3089
    %v3109 = vpack.c.b16 %v3092, %v3091
    %v3110 = vpack.c.b16 %v3094, %v3093
    %3127 = vmatprep.subr.bf16.mxu0 0
    %3128 = vmatpush1.bf16.msra.mxu0 %v3095
    %3129 = vmatprep.subr.bf16.mxu0 0
    %3130 = vmatpush1.bf16.msra.mxu0 %v3096
    %3131 = vmatprep.subr.bf16.mxu0 0
    %3132 = vmatpush1.bf16.msra.mxu0 %v3097
    %3133 = vmatprep.subr.bf16.mxu0 0
    %3134 = vmatpush1.bf16.msra.mxu0 %v3098
    %3135 = vmatprep.subr.bf16.mxu0 0
    %3136 = vmatpush1.bf16.msra.mxu0 %v3099
    %3137 = vmatprep.subr.bf16.mxu0 0
    %3138 = vmatpush1.bf16.msra.mxu0 %v3100
    %3139 = vmatprep.subr.bf16.mxu0 0
    %3140 = vmatpush1.bf16.msra.mxu0 %v3101
    %3141 = vmatprep.subr.bf16.mxu0 0
    %3142 = vmatpush1.bf16.msra.mxu0 %v3102
    %3143 = vmatprep.subr.bf16.mxu0 0
    %3144 = vmatpush1.bf16.msra.mxu0 %v3103
    %3145 = vmatprep.subr.bf16.mxu0 0
    %3146 = vmatpush1.bf16.msra.mxu0 %v3104
    %3147 = vmatprep.subr.bf16.mxu0 0
    %3148 = vmatpush1.bf16.msra.mxu0 %v3105
    %3149 = vmatprep.subr.bf16.mxu0 0
    %3150 = vmatpush1.bf16.msra.mxu0 %v3106
    %3151 = vmatprep.subr.bf16.mxu0 0
    %3152 = vmatpush1.bf16.msra.mxu0 %v3107
    %3153 = vmatprep.subr.bf16.mxu0 0
    %3154 = vmatpush1.bf16.msra.mxu0 %v3108
    %3155 = vmatprep.subr.bf16.mxu0 0
    %3156 = vmatpush1.bf16.msra.mxu0 %v3109
    %3157 = vmatprep.subr.bf16.mxu0 0
    %3158 = vmatpush1.bf16.msra.mxu0 %v3110
    %3159 = vmatprep.mubr.bf16.mxu0 %v2991
    %3160 = vmatmul.mubr.bf16.gmra.mrb[0].mxu0 %v2990
    %v3161 = vpop.f32.mrb[0].mxu0
    %v3162 = vadd.f32 %v3029, %v3161
    %v3163 = vpop.f32.mrb[0].mxu0
    %v3164 = vpop.f32.mrb[0].mxu0
    %v3165 = vpop.f32.mrb[0].mxu0
    %3166 = vdwg.mxu0
    %3167 = vst [vmem:[#allocation11] sm:$0xff] %v3162
    // Predicated region
    $region42: #{tpu_custom_call.1} parent=1 // pred_check
      _
    $region43: #{tpu_custom_call.1} parent=1 // pred_check_branch
      %3169 = sbr.rel (0) target = $region45
    $region44: #{tpu_custom_call.1} parent=1 // pred_region
      %s3171 = ssub.s32 128, 128
      %3172 = vsyncadd [#allocation4], %s3171
      %s3174 = sshll.u32 [#allocation11], 4
      %s3175 = int_to_ptr.vmem [resolvable:$true] %s3174
      %3177 = dma.vmem_to_hbm [thread:$0]  %s3175, 128, %s5, [#allocation4]
    $region45: #{tpu_custom_call.1} parent=1 // pred_fallthru
      _
    // Predicated region
    $region46: #{tpu_custom_call.1} parent=1 // pred_check
      _
    $region47: #{tpu_custom_call.1} parent=1 // pred_check_branch
      %3179 = sbr.rel (0) target = $region49
    $region48: #{tpu_custom_call.1} parent=1 // pred_region
      %3180 = dma.done [#allocation4], 128
    $region49: #{tpu_custom_call.1} parent=1 // pred_fallthru
      _
    %3181 = vsyncpa [#allocation3], 1
    %3182 = vsyncpa [#allocation6], 1
    %3183 = vsyncpa [#allocation9], 1
    %3184 = vsyncpa [#allocation4], 1

</llo_original>
